<compile_context>
chip_gen: v5e
topology: v5e:2x2
jax: 0.10.0
libtpu: 0.0.40
codegen_flags: <defaults>
</compile_context>

<pallas_src>
import functools

import jax
import jax.numpy as jnp
from jax import lax
from jax.experimental import pallas as pl
from jax.experimental.pallas import tpu as pltpu


def resblock_kernel(p_ref, w1_ref, b1_ref, w2_ref, b2_ref, o_ref, hcat_ref):
    """One (image, row-slab) grid step of the fused ResBlock.

    p_ref    : (1, 1, (Sh+2)*W, 9*Cin) bf16  im2col patches of the zero-padded input for the
                                             slab's Sh output rows plus one halo row above/below
                                             (centre tap FIRST -> columns [0:Cin] are x itself)
    w1_ref   : (9*Cin, C)      bf16  conv1 weights, rows in the same tap order
    b1_ref   : (1, C)          f32   conv1 bias
    w2_ref   : (3, 3*C+Cin, C) bf16  conv2 weights grouped per kernel row dy; the 1x1 skip
                                     weight wm appended to the dy==1 row (zeros otherwise)
    b2_ref   : (1, C)          f32   conv2 bias + skip bias (b2 + bm), folded in the wrapper
    o_ref    : (1, 1, Sh*W, C) f32   this slab's output rows
    hcat_ref : (Sh+2, W, 3*C+Cin) bf16  conv2 im2col scratch: row j, column x holds
                                        [h[j-1,x-1], h[j-1,x], h[j-1,x+1], x[j-1,x]]
                                        (row index relative to the slab's first output row)
    """
    s = pl.program_id(1)
    n_slabs = pl.num_programs(1)

    Shp2, W, Kc = hcat_ref.shape
    Sh = Shp2 - 2
    Cin = p_ref.shape[-1] // 9
    C = w1_ref.shape[1]

    # ---- conv1 (slab + halo rows): one fused im2col matmul, bf16 operands / f32 acc ----
    patches = p_ref[0, 0]                                            # ((Sh+2)*W, 9*Cin) bf16
    pre1 = jnp.dot(patches, w1_ref[...], preferred_element_type=jnp.float32)
    h = jnp.maximum(pre1 + b1_ref[...], 0.0)                         # ((Sh+2)*W, C) f32
    h3 = h.astype(hcat_ref.dtype).reshape(Shp2, W, C)                # single f32->bf16 cast
    xc = patches[:, 0:Cin].reshape(Shp2, W, Cin)                     # skip input, stays bf16

    # ---- build the bf16 conv2 im2col scratch: a few strided stores, zero ONLY halo strips ----
    hcat_ref[:, 1:W, 0:C] = h3[:, 0:W - 1, :]                        # dx=0 tap
    hcat_ref[:, :, C:2 * C] = h3                                     # dx=1 tap (centre)
    hcat_ref[:, 0:W - 1, 2 * C:3 * C] = h3[:, 1:W, :]                # dx=2 tap
    hcat_ref[:, :, 3 * C:3 * C + Cin] = xc                           # 1x1-skip input (dy==1 weights only)

    edge = jnp.zeros((Shp2, 1, C), hcat_ref.dtype)
    hcat_ref[:, 0:1, 0:C] = edge                                     # left edge of dx=0 tap
    hcat_ref[:, W - 1:W, 2 * C:3 * C] = edge                         # right edge of dx=2 tap

    zero_row = jnp.zeros((1, W, Kc), hcat_ref.dtype)

    @pl.when(s == 0)                                                 # halo row above the image
    def _():
        hcat_ref[0:1] = zero_row

    @pl.when(s == n_slabs - 1)                                       # halo row below the image
    def _():
        hcat_ref[Sh + 1:Sh + 2] = zero_row

    # ---- conv2 + fused 1x1 skip: 3 fat matmuls, K = 3*C + Cin each (already bf16) ----
    # (v6e note: fusing into a single K=3*Kc dot / f32 VMEM accumulator only pays off if the
    #  bundle shows MXU drain or vreg spills - this kernel is not MXU-bound at these sizes.)
    acc = None
    for dy in range(3):
        lhs = hcat_ref[dy:dy + Sh].reshape(Sh * W, Kc)               # contiguous major-dim slab
        part = jnp.dot(lhs, w2_ref[dy], preferred_element_type=jnp.float32)
        acc = part if acc is None else acc + part

    o_ref[0, 0] = jnp.maximum(acc + b2_ref[...], 0.0)                # + (b2 + bm), final ReLU


def _round_up(x, m):
    return (x + m - 1) // m * m


def _vmem_capacity_bytes():
    """Physical VMEM of the attached TPU; conservative v7x default if the query fails."""
    try:
        info = pltpu.get_tpu_info()
        cap = getattr(info, "vmem_capacity_bytes", None)
        if cap:
            return int(cap)
    except Exception:
        pass
    return 64 * 1024 * 1024


def _est_step_vmem_bytes(slab_rows, W, Cin, C):
    """Rough per-grid-step VMEM footprint (double-buffered I/O blocks + scratch + weights)."""
    Kc = 3 * C + Cin

    def tile(rows, cols, itemsize):
        sub = 16 if itemsize == 2 else 8                 # bf16 packs 2 rows per sublane
        return _round_up(max(rows, 1), sub) * _round_up(max(cols, 1), 128) * itemsize

    patch = tile((slab_rows + 2) * W, 9 * Cin, 2)
    out = tile(slab_rows * W, C, 4)
    hcat = (slab_rows + 2) * tile(W, Kc, 2)
    w1 = tile(9 * Cin, C, 2)
    w2 = 3 * tile(Kc, C, 2)
    bias = 2 * tile(1, C, 4)
    return 2 * patch + 2 * out + hcat + 2 * (w1 + w2 + bias)


def _choose_slab_rows(H, W, Cin, C, B, budget_bytes, min_total_steps=8):
    """Largest divisor of H whose per-step footprint fits `budget_bytes`, preferring enough
    total grid steps (>= min_total_steps) that both TensorCores on v7x get a real pipeline."""
    divisors = [d for d in range(1, H + 1) if H % d == 0]
    fits = [d for d in divisors if _est_step_vmem_bytes(d, W, Cin, C) <= budget_bytes]
    if not fits:
        fits = [1]
    deep = [d for d in fits if B * (H // d) >= min_total_steps]
    return max(deep) if deep else max(fits)


def resblock_pallas(x_nchw, params, *, mxu_dtype=jnp.bfloat16, slab_rows=None):
    """x_nchw: (B, Cin, H, W) float32 — same forward semantics as the PyTorch ResBlock."""
    w1, b1, w2, b2, wm, bm = params
    B, Cin, H, W = x_nchw.shape
    C = w1.shape[-1]
    Kc = 3 * C + Cin

    # ---- per-generation VMEM budget (64 MiB v7x, 128 MiB v5e/v6e) and slab height ----
    vmem_cap = _vmem_capacity_bytes()
    vmem_limit = int(vmem_cap * 0.70)            # headroom below physical capacity
    slab_budget = int(vmem_limit * 0.80)         # headroom for compiler-internal scratch
    if slab_rows is None:
        slab_rows = _choose_slab_rows(H, W, Cin, C, B, slab_budget)
    assert H % slab_rows == 0, "slab_rows must divide H"   # TODO(synk): ragged last slab
    Sh = slab_rows
    nS = H // Sh

    # ---- pure-JAX data prep (layout plumbing, not compute) ----
    # TODO(synk): if the surrounding model can stay NHWC, drop these transposes; building
    # conv1's im2col in-kernel (same halo machinery as conv2) would also remove the 9x HBM
    # expansion below — kept in the wrapper here for simplicity.
    x = jnp.transpose(x_nchw, (0, 2, 3, 1)).astype(mxu_dtype)          # NHWC, cast to bf16 once
    xpad = jnp.pad(x, ((0, 0), (1, 1), (1, 1), (0, 0)))

    # conv1 im2col, centre tap first so the kernel can reuse those columns for the 1x1 skip.
    taps = [(1, 1)] + [(dy, dx) for dy in range(3) for dx in range(3) if (dy, dx) != (1, 1)]
    patches = jnp.concatenate(
        [xpad[:, dy:dy + H, dx:dx + W, :] for dy, dx in taps], axis=-1)   # (B, H, W, 9*Cin)

    # Per-slab patch blocks with one halo row above/below (halo h rows recomputed per slab).
    patches_p = jnp.pad(patches, ((0, 0), (1, 1), (0, 0), (0, 0)))        # zero halo rows
    slabs = jnp.stack([patches_p[:, s * Sh:s * Sh + Sh + 2] for s in range(nS)], axis=1)
    slabs = slabs.reshape(B, nS, (Sh + 2) * W, 9 * Cin)

    # Weights: conv1 flattened in tap order; conv2 grouped per kernel row, 1x1 skip folded
    # into the centre row; skip bias folded into b2.
    w1f = jnp.concatenate([w1[dy, dx] for dy, dx in taps], axis=0).astype(mxu_dtype)   # (9*Cin, C)
    w2rows = []
    for dy in range(3):
        row = jnp.concatenate([w2[dy, 0], w2[dy, 1], w2[dy, 2]], axis=0)               # (3*C, C)
        tail = wm if dy == 1 else jnp.zeros_like(wm)
        w2rows.append(jnp.concatenate([row, tail], axis=0))                            # (Kc, C)
    w2rows = jnp.stack(w2rows, axis=0).astype(mxu_dtype)                               # (3, Kc, C)
    b1r = b1.reshape(1, C).astype(jnp.float32)
    b2f = (b2 + bm).reshape(1, C).astype(jnp.float32)

    out = pl.pallas_call(
        resblock_kernel,
        out_shape=jax.ShapeDtypeStruct((B, nS, Sh * W, C), jnp.float32),
        grid=(B, nS),
        in_specs=[
            pl.BlockSpec((1, 1, (Sh + 2) * W, 9 * Cin), lambda b, s: (b, s, 0, 0)),
            pl.BlockSpec((9 * Cin, C), lambda b, s: (0, 0)),
            pl.BlockSpec((1, C), lambda b, s: (0, 0)),
            pl.BlockSpec((3, Kc, C), lambda b, s: (0, 0, 0)),
            pl.BlockSpec((1, C), lambda b, s: (0, 0)),
        ],
        out_specs=pl.BlockSpec((1, 1, Sh * W, C), lambda b, s: (b, s, 0, 0)),
        scratch_shapes=[pltpu.VMEM((Sh + 2, W, Kc), jnp.bfloat16)],    # bf16 scratch (perf review)
        compiler_params=pltpu.CompilerParams(
            dimension_semantics=("parallel", "parallel"),   # independent steps; 2-TC sharding on v7x
            vmem_limit_bytes=vmem_limit,
        ),
    )(slabs, w1f, b1r, w2rows, b2f)

    # Output kept f32 for module-faithful semantics. If the consumer accepts bf16 / a
    # lane-dense (HW/2, 128) layout, that halves the masked C=64 writeback (biggest on v5e).
    out = out.reshape(B, H, W, C)
    return jnp.transpose(out, (0, 3, 1, 2))          # back to NCHW


def resblock_ref(x_nchw, params, operand_dtype=jnp.float32):
    """Pure-JAX/XLA reference; operand_dtype lets us mirror the kernel's bf16 MXU operands."""
    w1, b1, w2, b2, wm, bm = params
    x = jnp.transpose(x_nchw, (0, 2, 3, 1)).astype(operand_dtype)
    dn = lax.conv_dimension_numbers(x.shape, w1.shape, ("NHWC", "HWIO", "NHWC"))
    conv = functools.partial(lax.conv_general_dilated, window_strides=(1, 1),
                             padding="SAME", dimension_numbers=dn,
                             preferred_element_type=jnp.float32)
    ident = conv(x, wm[None, None].astype(operand_dtype)) + bm
    out = conv(x, w1.astype(operand_dtype)) + b1
    out = jnp.maximum(out, 0.0)
    out = conv(out.astype(operand_dtype), w2.astype(operand_dtype)) + b2
    out = jnp.maximum(out + ident, 0.0)
    return jnp.transpose(out, (0, 3, 1, 2))


if __name__ == "__main__":
    B, Cin, H, W = 2, 4, 16, 16
    Cout = 64

    key = jax.random.PRNGKey(0)
    kx, k1, k2, k3, k4, k5, k6 = jax.random.split(key, 7)

    x = jax.random.normal(kx, (B, Cin, H, W), dtype=jnp.float32)
    # Parameters stored as HWIO / (Cin, Cout), matching the nn.Conv2d shapes in __init__.
    w1 = 0.1 * jax.random.normal(k1, (3, 3, Cin, Cout), dtype=jnp.float32)
    b1 = 0.1 * jax.random.normal(k2, (Cout,), dtype=jnp.float32)
    w2 = 0.1 * jax.random.normal(k3, (3, 3, Cout, Cout), dtype=jnp.float32)
    b2 = 0.1 * jax.random.normal(k4, (Cout,), dtype=jnp.float32)
    wm = 0.1 * jax.random.normal(k5, (Cin, Cout), dtype=jnp.float32)
    bm = 0.1 * jax.random.normal(k6, (Cout,), dtype=jnp.float32)
    params = (w1, b1, w2, b2, wm, bm)

    out = jax.block_until_ready(jax.jit(resblock_pallas)(x, params))
    assert out.shape == (B, Cout, H, W), out.shape

    # Structural check: reference using the same bf16 MXU operands (f32 accumulation).
    ref_bf16 = jax.block_until_ready(resblock_ref(x, params, jnp.bfloat16))
    err_bf16 = float(jnp.max(jnp.abs(out - ref_bf16)))
    assert err_bf16 < 1e-2, err_bf16

    # Semantics check vs the full-f32 PyTorch-equivalent forward (bf16 operand rounding only).
    ref_f32 = jax.block_until_ready(resblock_ref(x, params, jnp.float32))
    err_f32 = float(jnp.max(jnp.abs(out - ref_f32)))
    assert err_f32 < 5e-2, err_f32

    print("KERNEL_OK")
</pallas_src>

<mosaic_0001>
module attributes {stable_mosaic.version = 11 : i64} {
  func.func @resblock_kernel(%arg0: i32, %arg1: i32, %arg2: memref<1x1x96x36xbf16, #tpu.memory_space<vmem>>, %arg3: memref<36x64xbf16, #tpu.memory_space<vmem>>, %arg4: memref<1x64xf32, #tpu.memory_space<vmem>>, %arg5: memref<3x196x64xbf16, #tpu.memory_space<vmem>>, %arg6: memref<1x64xf32, #tpu.memory_space<vmem>>, %arg7: memref<1x1x64x64xf32, #tpu.memory_space<vmem>>, %arg8: memref<6x16x196xbf16, #tpu.memory_space<vmem>>) attributes {dimension_semantics = [#tpu.dimension_semantics<parallel>, #tpu.dimension_semantics<parallel>], iteration_bounds = array<i64: 2, 4>, scalar_prefetch = 0 : i64, scratch_operands = 1 : i64, tpu.core_type = #tpu.core_type<tc>, window_params = [{transform_indices = @transform_0, window_bounds = array<i64: 1, 1, 96, 36>}, {pipeline_mode = #tpu.pipeline_mode<synchronous>, transform_indices = @transform_1, window_bounds = array<i64: 36, 64>}, {pipeline_mode = #tpu.pipeline_mode<synchronous>, transform_indices = @transform_2, window_bounds = array<i64: 1, 64>}, {pipeline_mode = #tpu.pipeline_mode<synchronous>, transform_indices = @transform_3, window_bounds = array<i64: 3, 196, 64>}, {pipeline_mode = #tpu.pipeline_mode<synchronous>, transform_indices = @transform_4, window_bounds = array<i64: 1, 64>}, {transform_indices = @transform_5, window_bounds = array<i64: 1, 1, 64, 64>}]} {
    %c0 = arith.constant 0 : index
    %c0_0 = arith.constant 0 : index
    %c0_1 = arith.constant 0 : index
    %c0_2 = arith.constant 0 : index
    %0 = vector.load %arg2[%c0, %c0_0, %c0_1, %c0_2] : memref<1x1x96x36xbf16, #tpu.memory_space<vmem>>, vector<1x1x96x36xbf16>
    %1 = vector.shape_cast %0 : vector<1x1x96x36xbf16> to vector<96x36xbf16>
    %c0_3 = arith.constant 0 : index
    %c0_4 = arith.constant 0 : index
    %2 = vector.load %arg3[%c0_3, %c0_4] : memref<36x64xbf16, #tpu.memory_space<vmem>>, vector<36x64xbf16>
    %cst = arith.constant dense<0.000000e+00> : vector<96x64xf32>
    %3 = tpu.matmul %1, %2, %cst {dimension_numbers = #tpu.dot_dimension_numbers<[1], [0], [0], [1], [0, 0, 1, 1], [], []>} : vector<96x36xbf16>, vector<36x64xbf16>, vector<96x64xf32> -> vector<96x64xf32>
    %c0_5 = arith.constant 0 : index
    %c0_6 = arith.constant 0 : index
    %4 = vector.load %arg4[%c0_5, %c0_6] : memref<1x64xf32, #tpu.memory_space<vmem>>, vector<1x64xf32>
    %5 = vector.broadcast %4 : vector<1x64xf32> to vector<96x64xf32>
    %6 = arith.addf %3, %5 : vector<96x64xf32>
    %cst_7 = arith.constant 0.000000e+00 : f32
    %7 = vector.broadcast %cst_7 : f32 to vector<96x64xf32>
    %8 = arith.maximumf %6, %7 : vector<96x64xf32>
    %9 = arith.truncf %8 : vector<96x64xf32> to vector<96x64xbf16>
    %10 = vector.shape_cast %9 : vector<96x64xbf16> to vector<6x16x64xbf16>
    %11 = vector.extract_strided_slice %1 {offsets = [0, 0], sizes = [96, 4], strides = [1, 1]} : vector<96x36xbf16> to vector<96x4xbf16>
    %12 = vector.shape_cast %11 : vector<96x4xbf16> to vector<6x16x4xbf16>
    %13 = vector.extract_strided_slice %10 {offsets = [0, 0, 0], sizes = [6, 15, 64], strides = [1, 1, 1]} : vector<6x16x64xbf16> to vector<6x15x64xbf16>
    %c0_8 = arith.constant 0 : index
    %c1 = arith.constant 1 : index
    %c0_9 = arith.constant 0 : index
    %14 = vector.load %arg8[%c0_8, %c1, %c0_9] : memref<6x16x196xbf16, #tpu.memory_space<vmem>>, vector<6x15x64xbf16>
    tpu.vector_store %arg8[%c0_8, %c1, %c0_9], %13 {strides = array<i32>} : memref<6x16x196xbf16, #tpu.memory_space<vmem>>, vector<6x15x64xbf16>,
    %c0_10 = arith.constant 0 : index
    %c0_11 = arith.constant 0 : index
    %c64 = arith.constant 64 : index
    %15 = vector.load %arg8[%c0_10, %c0_11, %c64] : memref<6x16x196xbf16, #tpu.memory_space<vmem>>, vector<6x16x64xbf16>
    tpu.vector_store %arg8[%c0_10, %c0_11, %c64], %10 {strides = array<i32>} : memref<6x16x196xbf16, #tpu.memory_space<vmem>>, vector<6x16x64xbf16>,
    %16 = vector.extract_strided_slice %10 {offsets = [0, 1, 0], sizes = [6, 15, 64], strides = [1, 1, 1]} : vector<6x16x64xbf16> to vector<6x15x64xbf16>
    %c0_12 = arith.constant 0 : index
    %c0_13 = arith.constant 0 : index
    %c128 = arith.constant 128 : index
    %17 = vector.load %arg8[%c0_12, %c0_13, %c128] : memref<6x16x196xbf16, #tpu.memory_space<vmem>>, vector<6x15x64xbf16>
    tpu.vector_store %arg8[%c0_12, %c0_13, %c128], %16 {strides = array<i32>} : memref<6x16x196xbf16, #tpu.memory_space<vmem>>, vector<6x15x64xbf16>,
    %c0_14 = arith.constant 0 : index
    %c0_15 = arith.constant 0 : index
    %c192 = arith.constant 192 : index
    %18 = vector.load %arg8[%c0_14, %c0_15, %c192] : memref<6x16x196xbf16, #tpu.memory_space<vmem>>, vector<6x16x4xbf16>
    tpu.vector_store %arg8[%c0_14, %c0_15, %c192], %12 {strides = array<i32>} : memref<6x16x196xbf16, #tpu.memory_space<vmem>>, vector<6x16x4xbf16>,
    %cst_16 = arith.constant 0.000000e+00 : bf16
    %19 = vector.broadcast %cst_16 : bf16 to vector<6x1x64xbf16>
    %c0_17 = arith.constant 0 : index
    %c0_18 = arith.constant 0 : index
    %c0_19 = arith.constant 0 : index
    %20 = vector.load %arg8[%c0_17, %c0_18, %c0_19] : memref<6x16x196xbf16, #tpu.memory_space<vmem>>, vector<6x1x64xbf16>
    tpu.vector_store %arg8[%c0_17, %c0_18, %c0_19], %19 {strides = array<i32>} : memref<6x16x196xbf16, #tpu.memory_space<vmem>>, vector<6x1x64xbf16>,
    %c0_20 = arith.constant 0 : index
    %c15 = arith.constant 15 : index
    %c128_21 = arith.constant 128 : index
    %21 = vector.load %arg8[%c0_20, %c15, %c128_21] : memref<6x16x196xbf16, #tpu.memory_space<vmem>>, vector<6x1x64xbf16>
    tpu.vector_store %arg8[%c0_20, %c15, %c128_21], %19 {strides = array<i32>} : memref<6x16x196xbf16, #tpu.memory_space<vmem>>, vector<6x1x64xbf16>,
    %cst_22 = arith.constant 0.000000e+00 : bf16
    %22 = vector.broadcast %cst_22 : bf16 to vector<1x16x196xbf16>
    %c0_i32 = arith.constant 0 : i32
    %23 = arith.cmpi eq, %arg1, %c0_i32 : i32
    %24 = arith.extui %23 : i1 to i32
    %c0_i32_23 = arith.constant 0 : i32
    %25 = arith.cmpi ne, %24, %c0_i32_23 : i32
    scf.if %25 {
      %c0_52 = arith.constant 0 : index
      %c0_53 = arith.constant 0 : index
      %c0_54 = arith.constant 0 : index
      %54 = vector.load %arg8[%c0_52, %c0_53, %c0_54] : memref<6x16x196xbf16, #tpu.memory_space<vmem>>, vector<1x16x196xbf16>
      tpu.vector_store %arg8[%c0_52, %c0_53, %c0_54], %22 {strides = array<i32>} : memref<6x16x196xbf16, #tpu.memory_space<vmem>>, vector<1x16x196xbf16>,
    } else {
    }
    %c3_i32 = arith.constant 3 : i32
    %26 = arith.cmpi eq, %arg1, %c3_i32 : i32
    %27 = arith.extui %26 : i1 to i32
    %c0_i32_24 = arith.constant 0 : i32
    %28 = arith.cmpi ne, %27, %c0_i32_24 : i32
    scf.if %28 {
      %c5 = arith.constant 5 : index
      %c0_52 = arith.constant 0 : index
      %c0_53 = arith.constant 0 : index
      %54 = vector.load %arg8[%c5, %c0_52, %c0_53] : memref<6x16x196xbf16, #tpu.memory_space<vmem>>, vector<1x16x196xbf16>
      tpu.vector_store %arg8[%c5, %c0_52, %c0_53], %22 {strides = array<i32>} : memref<6x16x196xbf16, #tpu.memory_space<vmem>>, vector<1x16x196xbf16>,
    } else {
    }
    %c0_25 = arith.constant 0 : index
    %c0_26 = arith.constant 0 : index
    %c0_27 = arith.constant 0 : index
    %29 = vector.load %arg8[%c0_25, %c0_26, %c0_27] : memref<6x16x196xbf16, #tpu.memory_space<vmem>>, vector<4x16x196xbf16>
    %30 = vector.shape_cast %29 : vector<4x16x196xbf16> to vector<64x196xbf16>
    %c0_28 = arith.constant 0 : index
    %c0_29 = arith.constant 0 : index
    %c0_30 = arith.constant 0 : index
    %31 = vector.load %arg5[%c0_28, %c0_29, %c0_30] : memref<3x196x64xbf16, #tpu.memory_space<vmem>>, vector<1x196x64xbf16>
    %32 = vector.shape_cast %31 : vector<1x196x64xbf16> to vector<196x64xbf16>
    %cst_31 = arith.constant dense<0.000000e+00> : vector<64x64xf32>
    %33 = tpu.matmul %30, %32, %cst_31 {dimension_numbers = #tpu.dot_dimension_numbers<[1], [0], [0], [1], [0, 0, 1, 1], [], []>} : vector<64x196xbf16>, vector<196x64xbf16>, vector<64x64xf32> -> vector<64x64xf32>
    %c1_32 = arith.constant 1 : index
    %c0_33 = arith.constant 0 : index
    %c0_34 = arith.constant 0 : index
    %34 = vector.load %arg8[%c1_32, %c0_33, %c0_34] : memref<6x16x196xbf16, #tpu.memory_space<vmem>>, vector<4x16x196xbf16>
    %35 = vector.shape_cast %34 : vector<4x16x196xbf16> to vector<64x196xbf16>
    %c1_35 = arith.constant 1 : index
    %c0_36 = arith.constant 0 : index
    %c0_37 = arith.constant 0 : index
    %36 = vector.load %arg5[%c1_35, %c0_36, %c0_37] : memref<3x196x64xbf16, #tpu.memory_space<vmem>>, vector<1x196x64xbf16>
    %37 = vector.shape_cast %36 : vector<1x196x64xbf16> to vector<196x64xbf16>
    %cst_38 = arith.constant dense<0.000000e+00> : vector<64x64xf32>
    %38 = tpu.matmul %35, %37, %cst_38 {dimension_numbers = #tpu.dot_dimension_numbers<[1], [0], [0], [1], [0, 0, 1, 1], [], []>} : vector<64x196xbf16>, vector<196x64xbf16>, vector<64x64xf32> -> vector<64x64xf32>
    %39 = arith.addf %33, %38 : vector<64x64xf32>
    %c2 = arith.constant 2 : index
    %c0_39 = arith.constant 0 : index
    %c0_40 = arith.constant 0 : index
    %40 = vector.load %arg8[%c2, %c0_39, %c0_40] : memref<6x16x196xbf16, #tpu.memory_space<vmem>>, vector<4x16x196xbf16>
    %41 = vector.shape_cast %40 : vector<4x16x196xbf16> to vector<64x196xbf16>
    %c2_41 = arith.constant 2 : index
    %c0_42 = arith.constant 0 : index
    %c0_43 = arith.constant 0 : index
    %42 = vector.load %arg5[%c2_41, %c0_42, %c0_43] : memref<3x196x64xbf16, #tpu.memory_space<vmem>>, vector<1x196x64xbf16>
    %43 = vector.shape_cast %42 : vector<1x196x64xbf16> to vector<196x64xbf16>
    %cst_44 = arith.constant dense<0.000000e+00> : vector<64x64xf32>
    %44 = tpu.matmul %41, %43, %cst_44 {dimension_numbers = #tpu.dot_dimension_numbers<[1], [0], [0], [1], [0, 0, 1, 1], [], []>} : vector<64x196xbf16>, vector<196x64xbf16>, vector<64x64xf32> -> vector<64x64xf32>
    %45 = arith.addf %39, %44 : vector<64x64xf32>
    %c0_45 = arith.constant 0 : index
    %c0_46 = arith.constant 0 : index
    %46 = vector.load %arg6[%c0_45, %c0_46] : memref<1x64xf32, #tpu.memory_space<vmem>>, vector<1x64xf32>
    %47 = vector.broadcast %46 : vector<1x64xf32> to vector<64x64xf32>
    %48 = arith.addf %45, %47 : vector<64x64xf32>
    %cst_47 = arith.constant 0.000000e+00 : f32
    %49 = vector.broadcast %cst_47 : f32 to vector<64x64xf32>
    %50 = arith.maximumf %48, %49 : vector<64x64xf32>
    %c0_48 = arith.constant 0 : index
    %c0_49 = arith.constant 0 : index
    %c0_50 = arith.constant 0 : index
    %c0_51 = arith.constant 0 : index
    %51 = vector.load %arg7[%c0_48, %c0_49, %c0_50, %c0_51] : memref<1x1x64x64xf32, #tpu.memory_space<vmem>>, vector<1x1x64x64xf32>
    %52 = vector.shape_cast %51 : vector<1x1x64x64xf32> to vector<64x64xf32>
    %53 = vector.shape_cast %50 : vector<64x64xf32> to vector<1x1x64x64xf32>
    tpu.vector_store %arg7[%c0_48, %c0_49, %c0_50, %c0_51], %53 {strides = array<i32>} : memref<1x1x64x64xf32, #tpu.memory_space<vmem>>, vector<1x1x64x64xf32>,
    return
  }
  func.func @transform_0(%arg0: i32, %arg1: i32) -> (i32, i32, i32, i32) {
    %c0_i32 = arith.constant 0 : i32
    %c0_i32_0 = arith.constant 0 : i32
    %c0_i32_1 = arith.constant 0 : i32
    return %arg0, %arg1, %c0_i32, %c0_i32_0 : i32, i32, i32, i32
  }
  func.func @transform_1(%arg0: i32, %arg1: i32) -> (i32, i32) {
    %c0_i32 = arith.constant 0 : i32
    %c0_i32_0 = arith.constant 0 : i32
    %c0_i32_1 = arith.constant 0 : i32
    return %c0_i32, %c0_i32_0 : i32, i32
  }
  func.func @transform_2(%arg0: i32, %arg1: i32) -> (i32, i32) {
    %c0_i32 = arith.constant 0 : i32
    %c0_i32_0 = arith.constant 0 : i32
    %c0_i32_1 = arith.constant 0 : i32
    return %c0_i32, %c0_i32_0 : i32, i32
  }
  func.func @transform_3(%arg0: i32, %arg1: i32) -> (i32, i32, i32) {
    %c0_i32 = arith.constant 0 : i32
    %c0_i32_0 = arith.constant 0 : i32
    %c0_i32_1 = arith.constant 0 : i32
    %c0_i32_2 = arith.constant 0 : i32
    return %c0_i32, %c0_i32_0, %c0_i32_1 : i32, i32, i32
  }
  func.func @transform_4(%arg0: i32, %arg1: i32) -> (i32, i32) {
    %c0_i32 = arith.constant 0 : i32
    %c0_i32_0 = arith.constant 0 : i32
    %c0_i32_1 = arith.constant 0 : i32
    return %c0_i32, %c0_i32_0 : i32, i32
  }
  func.func @transform_5(%arg0: i32, %arg1: i32) -> (i32, i32, i32, i32) {
    %c0_i32 = arith.constant 0 : i32
    %c0_i32_0 = arith.constant 0 : i32
    %c0_i32_1 = arith.constant 0 : i32
    return %arg0, %arg1, %c0_i32, %c0_i32_0 : i32, i32, i32, i32
  }
}

</mosaic_0001>

<llo_original>
// kernel: resblock_pallas.1
$region0: #{resblock_pallas.1}
  #allocation0 [shape = 'u32[]', space=smem, size = 0x4, offset = 0x4, fixed_abs, tag = 'smem constant byte address 0x4 - core index']
  #allocation1 [shape = 'u32[72,128]{1,0:T(1,128)}', space=vmem, size = 0x9000, scoped, tag = 'internal scratch']
  #allocation2 [shape = 'bf16[6,16,196]{2,1,0:T(8,128)(2,1)}', space=vmem, size = 0xc000, scoped, tag = 'scratch operand']
  %s0 = inlined_call_operand.vmem [shape: bf16[2,4,96,36], index: 0, kind: input, shape index: {}]
  %s1 = inlined_call_operand.vmem [shape: bf16[36,64], index: 1, kind: input, shape index: {}]
  %s2 = inlined_call_operand.vmem [shape: f32[1,64], index: 2, kind: input, shape index: {}]
  %s3 = inlined_call_operand.vmem [shape: bf16[3,196,64], index: 3, kind: input, shape index: {}]
  %s4 = inlined_call_operand.vmem [shape: f32[1,64], index: 4, kind: input, shape index: {}]
  %s5 = inlined_call_operand.hbm [shape: f32[2,4,64,64], index: 5, kind: output, shape index: {}]
  %s6 = sld [smem:[#allocation0]]
  $region61: #{resblock_pallas.1} parent=0
    _
  %s8 = ssub.s32 1, %s6
  %s9 = scalar_select 0, %s8, %s6
  $region1: #{resblock_pallas.1} parent=0
    #allocation3 [shape = 'u8[65536]{0}', space=vmem, size = 0x10000, scoped, tag = 'output window, operand 0']
    #allocation4 [shape = 's32[2]{0}', space=sflag, size = 0x8, scoped, tag = 'scoped memory for resblock_pallas.1']
    %10 = vsyncpa [#allocation4], 0
    %s11 = scalar_lea.sflag [#allocation4], 1
    %12 = vsyncpa %s11, 0
    loop: start=0, step=1, limit=10
    $region2: #{resblock_pallas.1} parent=1 // loop_pre_header
      _
    $region3: #{resblock_pallas.1} parent=1 // loop_header
      %s14 = sphi 0, %s18
      %p15 = scmp.ge.s32.totalorder %s14, 10
      %s21 = sphi 0, %s33
      %s22 = sphi 0, %s29
      %s23 = sphi 0, %s21
      %s24 = sphi 0, %s22
      %s25 = sphi 0, %s23
      %s26 = sphi 0, %s24
      %s38 = sphi 0, %s40
      %s41 = sphi 0, %s38
      %s42 = sphi 0, %s41
      %s58 = sphi 0, %s42
      %s62 = sphi 0, %s62
      %s64 = sphi 0, %s62
      %s65 = sphi 0, %s64
      %s79 = sphi 0, %s65
      %s83 = sphi 0, %s83
      %s85 = sphi 0, %s83
      %s86 = sphi 0, %s85
      %s100 = sphi 0, %s86
      %s104 = sphi 0, %s104
      %s106 = sphi 0, %s104
      %s107 = sphi 0, %s106
      %s121 = sphi 0, %s107
      %s125 = sphi 0, %s125
      %s127 = sphi 0, %s125
      %s128 = sphi 0, %s127
      %s142 = sphi 0, %s128
      %s150 = sphi 0, %s152
      %s153 = sphi 0, %s150
      %s154 = sphi 0, %s153
      %s170 = sphi 0, %s154
    $region4: #{resblock_pallas.1} parent=1 // loop_header_branch
      %17 = sbr.rel (%p15) target = $region8
    $region5: #{resblock_pallas.1} parent=1 // loop_body
      %s19 = ssub.s32 %s14, 1
      %s20 = ssub.s32 %s14, 2
      %s27 = sadd.s32 1, %s22
      %p28 = scmp.ge.s32.totalorder %s27, 4
      %s29 = scalar_select %p28, 0, %s27
      %s30 = sadd.s32 1, %s21
      %s31 = scalar_select %p28, %s30, %s21
      %p32 = scmp.ge.s32.totalorder %s31, 2
      %s33 = scalar_select %p32, 0, %s31
      %s34 = ssub.s32 %s21, %s33
      %s35 = ssub.s32 %s22, %s29
      %s36 = sor.u32 %s34, %s35
      %p37 = scmp.eq.s32.totalorder %s36, 0
      %s39 = sadd.s32 %s38, 1
      %s40 = scalar_select %p37, %s38, %s39
      %p43 = pneg %p37
      %p44 = scmp.eq.s32.totalorder %s14, 7
      %p45 = por %p43, %p44
      %p46 = scmp.ne.s32.totalorder %s38, %s41
      %p47 = scmp.eq.s32.totalorder %s14, 0
      %p48 = por %p46, %p47
      %p49 = scmp.ne.s32.totalorder %s38, %s41
      %p50 = scmp.eq.s32.totalorder %s19, 7
      %p51 = por %p49, %p50
      %p52 = scmp.ne.s32.totalorder %s41, %s42
      %p53 = scmp.eq.s32.totalorder %s19, 0
      %p54 = por %p52, %p53
      %p55 = scmp.ne.s32.totalorder %s41, %s42
      %p56 = scmp.eq.s32.totalorder %s20, 7
      %p57 = por %p55, %p56
      %p59 = scmp.ne.s32.totalorder %s42, %s58
      %p60 = scmp.eq.s32.totalorder %s20, 0
      %p61 = por %p59, %p60
      %s63 = sadd.s32 %s62, 1
      %p66 = scmp.eq.s32.totalorder %s14, 7
      %p67 = scmp.ne.s32.totalorder %s62, %s64
      %p68 = scmp.eq.s32.totalorder %s14, 0
      %p69 = por %p67, %p68
      %p70 = scmp.ne.s32.totalorder %s62, %s64
      %p71 = scmp.eq.s32.totalorder %s19, 7
      %p72 = por %p70, %p71
      %p73 = scmp.ne.s32.totalorder %s64, %s65
      %p74 = scmp.eq.s32.totalorder %s19, 0
      %p75 = por %p73, %p74
      %p76 = scmp.ne.s32.totalorder %s64, %s65
      %p77 = scmp.eq.s32.totalorder %s20, 7
      %p78 = por %p76, %p77
      %p80 = scmp.ne.s32.totalorder %s65, %s79
      %p81 = scmp.eq.s32.totalorder %s20, 0
      %p82 = por %p80, %p81
      %s84 = sadd.s32 %s83, 1
      %p87 = scmp.eq.s32.totalorder %s14, 7
      %p88 = scmp.ne.s32.totalorder %s83, %s85
      %p89 = scmp.eq.s32.totalorder %s14, 0
      %p90 = por %p88, %p89
      %p91 = scmp.ne.s32.totalorder %s83, %s85
      %p92 = scmp.eq.s32.totalorder %s19, 7
      %p93 = por %p91, %p92
      %p94 = scmp.ne.s32.totalorder %s85, %s86
      %p95 = scmp.eq.s32.totalorder %s19, 0
      %p96 = por %p94, %p95
      %p97 = scmp.ne.s32.totalorder %s85, %s86
      %p98 = scmp.eq.s32.totalorder %s20, 7
      %p99 = por %p97, %p98
      %p101 = scmp.ne.s32.totalorder %s86, %s100
      %p102 = scmp.eq.s32.totalorder %s20, 0
      %p103 = por %p101, %p102
      %s105 = sadd.s32 %s104, 1
      %p108 = scmp.eq.s32.totalorder %s14, 7
      %p109 = scmp.ne.s32.totalorder %s104, %s106
      %p110 = scmp.eq.s32.totalorder %s14, 0
      %p111 = por %p109, %p110
      %p112 = scmp.ne.s32.totalorder %s104, %s106
      %p113 = scmp.eq.s32.totalorder %s19, 7
      %p114 = por %p112, %p113
      %p115 = scmp.ne.s32.totalorder %s106, %s107
      %p116 = scmp.eq.s32.totalorder %s19, 0
      %p117 = por %p115, %p116
      %p118 = scmp.ne.s32.totalorder %s106, %s107
      %p119 = scmp.eq.s32.totalorder %s20, 7
      %p120 = por %p118, %p119
      %p122 = scmp.ne.s32.totalorder %s107, %s121
      %p123 = scmp.eq.s32.totalorder %s20, 0
      %p124 = por %p122, %p123
      %s126 = sadd.s32 %s125, 1
      %p129 = scmp.eq.s32.totalorder %s14, 7
      %p130 = scmp.ne.s32.totalorder %s125, %s127
      %p131 = scmp.eq.s32.totalorder %s14, 0
      %p132 = por %p130, %p131
      %p133 = scmp.ne.s32.totalorder %s125, %s127
      %p134 = scmp.eq.s32.totalorder %s19, 7
      %p135 = por %p133, %p134
      %p136 = scmp.ne.s32.totalorder %s127, %s128
      %p137 = scmp.eq.s32.totalorder %s19, 0
      %p138 = por %p136, %p137
      %p139 = scmp.ne.s32.totalorder %s127, %s128
      %p140 = scmp.eq.s32.totalorder %s20, 7
      %p141 = por %p139, %p140
      %p143 = scmp.ne.s32.totalorder %s128, %s142
      %p144 = scmp.eq.s32.totalorder %s20, 0
      %p145 = por %p143, %p144
      %s146 = ssub.s32 %s21, %s33
      %s147 = ssub.s32 %s22, %s29
      %s148 = sor.u32 %s146, %s147
      %p149 = scmp.eq.s32.totalorder %s148, 0
      %s151 = sadd.s32 %s150, 1
      %s152 = scalar_select %p149, %s150, %s151
      %p155 = pneg %p149
      %p156 = scmp.eq.s32.totalorder %s14, 7
      %p157 = por %p155, %p156
      %p158 = scmp.ne.s32.totalorder %s150, %s153
      %p159 = scmp.eq.s32.totalorder %s14, 0
      %p160 = por %p158, %p159
      %p161 = scmp.ne.s32.totalorder %s150, %s153
      %p162 = scmp.eq.s32.totalorder %s19, 7
      %p163 = por %p161, %p162
      %p164 = scmp.ne.s32.totalorder %s153, %s154
      %p165 = scmp.eq.s32.totalorder %s19, 0
      %p166 = por %p164, %p165
      %p167 = scmp.ne.s32.totalorder %s153, %s154
      %p168 = scmp.eq.s32.totalorder %s20, 7
      %p169 = por %p167, %p168
      %p171 = scmp.ne.s32.totalorder %s154, %s170
      %p172 = scmp.eq.s32.totalorder %s20, 0
      %p173 = por %p171, %p172
      %p174 = scmp.le.s32.totalorder 1, %s14
      %p175 = scmp.lt.s32.totalorder %s14, 9
      %p176 = pnand %p174, %p175
      %p177 = pneg %p176
      // Predicated region
      $region9: #{resblock_pallas.1} parent=5 // pred_check
        _
      $region10: #{resblock_pallas.1} parent=5 // pred_check_branch
        %179 = sbr.rel (%p176) target = $region12
      $region11: #{resblock_pallas.1} parent=5 // pred_region
        %s180 = ssub.s32 %s14, 1
        // Predicated region
        $region13: #{resblock_pallas.1} parent=11 // pred_check
          %p181 = pneg %p75
        $region14: #{resblock_pallas.1} parent=11 // pred_check_branch
          %183 = sbr.rel (%p181) target = $region16
        $region15: #{resblock_pallas.1} parent=11 // pred_region
          _
        $region16: #{resblock_pallas.1} parent=11 // pred_fallthru
          _
        // Predicated region
        $region17: #{resblock_pallas.1} parent=11 // pred_check
          %p184 = pneg %p96
        $region18: #{resblock_pallas.1} parent=11 // pred_check_branch
          %186 = sbr.rel (%p184) target = $region20
        $region19: #{resblock_pallas.1} parent=11 // pred_region
          _
        $region20: #{resblock_pallas.1} parent=11 // pred_fallthru
          _
        // Predicated region
        $region21: #{resblock_pallas.1} parent=11 // pred_check
          %p187 = pneg %p117
        $region22: #{resblock_pallas.1} parent=11 // pred_check_branch
          %189 = sbr.rel (%p187) target = $region24
        $region23: #{resblock_pallas.1} parent=11 // pred_region
          _
        $region24: #{resblock_pallas.1} parent=11 // pred_fallthru
          _
        // Predicated region
        $region25: #{resblock_pallas.1} parent=11 // pred_check
          %p190 = pneg %p138
        $region26: #{resblock_pallas.1} parent=11 // pred_check_branch
          %192 = sbr.rel (%p190) target = $region28
        $region27: #{resblock_pallas.1} parent=11 // pred_region
          _
        $region28: #{resblock_pallas.1} parent=11 // pred_fallthru
          _
      $region12: #{resblock_pallas.1} parent=5 // pred_fallthru
        _
      %p193 = scmp.lt.s32.totalorder %s14, 8
      // Predicated region
      $region29: #{resblock_pallas.1} parent=5 // pred_check
        %p194 = pneg %p193
      $region30: #{resblock_pallas.1} parent=5 // pred_check_branch
        %196 = sbr.rel (%p194) target = $region32
      $region31: #{resblock_pallas.1} parent=5 // pred_region
        // Predicated region
        $region33: #{resblock_pallas.1} parent=31 // pred_check
          %p197 = pneg %p48
        $region34: #{resblock_pallas.1} parent=31 // pred_check_branch
          %199 = sbr.rel (%p197) target = $region36
        $region35: #{resblock_pallas.1} parent=31 // pred_region
          %p200 = scmp.lt.s32.totalorder %s21, 1
          %s201 = scalar_select %p200, %s21, 1
          %p202 = scmp.lt.s32.totalorder %s22, 3
          %s203 = scalar_select %p202, %s22, 3
          %s204 = smul.addr %s203, 12
          %s205 = smul.addr %s201, 48
          %s206 = sadd.s32 %s204, %s205
          %s207 = smul.addr %s206, 4
          %s208 = scalar_lea.vmem %s0, %s207
        $region36: #{resblock_pallas.1} parent=31 // pred_fallthru
          _
      $region32: #{resblock_pallas.1} parent=5 // pred_fallthru
        _
      %p209 = scmp.le.s32.totalorder 1, %s14
      %p210 = scmp.lt.s32.totalorder %s14, 9
      %p211 = pnand %p209, %p210
      %p212 = pneg %p211
      // Predicated region
      $region37: #{resblock_pallas.1} parent=5 // pred_check
        _
      $region38: #{resblock_pallas.1} parent=5 // pred_check_branch
        %214 = sbr.rel (%p211) target = $region40
      $region39: #{resblock_pallas.1} parent=5 // pred_region
        %s215 = ssub.s32 %s14, 1
        %p216 = scmp.lt.s32.totalorder %s23, 1
        %s217 = scalar_select %p216, %s23, 1
        %p218 = scmp.lt.s32.totalorder %s24, 3
        %s219 = scalar_select %p218, %s24, 3
        %s220 = smul.addr %s219, 12
        %s221 = smul.addr %s217, 48
        %s222 = sadd.s32 %s220, %s221
        %s223 = smul.addr %s222, 4
        %s224 = scalar_lea.vmem %s0, %s223
        %p225 = pneg %p54
        %p226 = pneg %p51
        %p227 = pneg %p75
        %p228 = pneg %p72
        %p229 = pneg %p96
        %p230 = pneg %p93
        %p231 = pneg %p117
        %p232 = pneg %p114
        %p233 = pneg %p138
        %p234 = pneg %p135
        %p235 = pneg %p166
        %p236 = pneg %p163
        %s237 = sand.u32 %s153, 1
        %s238 = scalar_lea.sflag [#allocation4], %s237
        %s239 = sand.u32 %s153, 1
        %s240 = smul.addr %s239, 64
        %s241 = scalar_lea.vmem [#allocation3], %s240
        %p242 = scmp.lt.s32.totalorder %s23, 1
        %s243 = scalar_select %p242, %s23, 1
        %p244 = scmp.lt.s32.totalorder %s24, 3
        %s245 = scalar_select %p244, %s24, 3
        %s246 = smul.addr %s245, 12
        %s247 = smul.addr %s243, 48
        %s248 = sadd.s32 %s246, %s247
        %s249 = smul.addr %s248, 4
        %s250 = scalar_lea.vmem %s0, %s249
        %v252 = vld [vmem:[%s250] sm:$0xf]
        %v253 = vld [vmem:[%s250 + $0x4] sm:$0xf]
        %v254 = vld [vmem:[%s250 + $0x8] sm:$0xf]
        %v255 = vld [vmem:[%s250 + $0xc] sm:$0xf]
        %v256 = vld [vmem:[%s250 + $0x10] sm:$0xf]
        %v257 = vld [vmem:[%s250 + $0x14] sm:$0xf]
        %v258 = vld [vmem:[%s250 + $0x18] sm:$0xf]
        %v259 = vld [vmem:[%s250 + $0x1c] sm:$0xf]
        %v260 = vld [vmem:[%s250 + $0x20] sm:$0xf]
        %v261 = vld [vmem:[%s250 + $0x24] sm:$0xf]
        %v262 = vld [vmem:[%s250 + $0x28] sm:$0xf]
        %v263 = vld [vmem:[%s250 + $0x2c] sm:$0xf]
        %v264 = vld [vmem:[%s1] sm:$0xf]
        %v265 = vld [vmem:[%s1 + $0x4] sm:$0xf]
        %v266 = vld [vmem:[%s1 + $0x8] sm:$0xf]
        %v267 = vld [vmem:[%s1 + $0xc] sm:$0xf]
        %v268 = vld [vmem:[%s1 + $0x10] sm:$0x3]
        %v269 = vld [vmem:[%s2] sm:$0x1]
        %v271 = vperm.slane %v269, 0
        %v285 = vunpack.c.l.b16 %v252
        %v286 = vunpack.c.l.b16 %v253
        %v287 = vunpack.c.l.b16 %v254
        %v288 = vunpack.c.l.b16 %v255
        %v289 = vunpack.c.l.b16 %v256
        %v290 = vunpack.c.l.b16 %v257
        %v291 = vunpack.c.l.b16 %v258
        %v292 = vunpack.c.l.b16 %v259
        %v293 = vunpack.c.l.b16 %v260
        %v294 = vunpack.c.l.b16 %v261
        %v295 = vunpack.c.l.b16 %v262
        %v296 = vunpack.c.l.b16 %v263
        %v297 = vpack.c.b16 %v286, %v285
        %v298 = vpack.c.b16 %v288, %v287
        %v299 = vpack.c.b16 %v290, %v289
        %v300 = vpack.c.b16 %v292, %v291
        %v301 = vpack.c.b16 %v294, %v293
        %v302 = vpack.c.b16 %v296, %v295
        %v308 = vunpack.c.l.b16 %v264
        %v309 = vunpack.c.l.b16 %v265
        %v310 = vunpack.c.l.b16 %v266
        %v311 = vunpack.c.l.b16 %v267
        %v312 = vunpack.c.l.b16 %v268
        %v313 = vpack.c.b16 %v309, %v308
        %v314 = vpack.c.b16 %v311, %v310
        %v315 = vpack.c.b16 %v312, %v312
        %vm318 = vcmask 293888
        %v320 = vsel %vm318, %v297, 0
        %v323 = vsel %vm318, %v298, 0
        %v326 = vsel %vm318, %v299, 0
        %v329 = vsel %vm318, %v300, 0
        %v332 = vsel %vm318, %v301, 0
        %v335 = vsel %vm318, %v302, 0
        %vm337 = vcmask 1041408
        %v339 = vsel %vm337, %v315, 0
        %341 = vmatpush.bf16.msra.mxu0 0
        %342 = vmatpush.bf16.msra.mxu0 0
        %343 = vmatpush.bf16.msra.mxu0 0
        %344 = vmatpush.bf16.msra.mxu0 0
        %345 = vmatpush.bf16.msra.mxu0 0
        %346 = vmatpush.bf16.msra.mxu0 %v339
        %347 = vmatpush.bf16.msra.mxu0 %v314
        %348 = vmatpush.bf16.msra.mxu0 %v313
        %349 = vmatmul.bf16.gmra.mxu0 %v320
        %v350 = vpop.f32.mrf.mxu0
        %v351 = vadd.f32 %v271, %v350
        %v352 = vpop.f32.mrf.mxu0
        %v353 = vadd.f32 %v271, %v352
        %354 = vmatmul.bf16.gmra.mxu0 %v323
        %v355 = vpop.f32.mrf.mxu0
        %v356 = vadd.f32 %v271, %v355
        %v357 = vpop.f32.mrf.mxu0
        %v358 = vadd.f32 %v271, %v357
        %359 = vmatmul.bf16.gmra.mxu0 %v326
        %v360 = vpop.f32.mrf.mxu0
        %v361 = vadd.f32 %v271, %v360
        %v362 = vpop.f32.mrf.mxu0
        %v363 = vadd.f32 %v271, %v362
        %364 = vmatmul.bf16.gmra.mxu0 %v329
        %v365 = vpop.f32.mrf.mxu0
        %v366 = vadd.f32 %v271, %v365
        %v367 = vpop.f32.mrf.mxu0
        %v368 = vadd.f32 %v271, %v367
        %369 = vmatmul.bf16.gmra.mxu0 %v332
        %v370 = vpop.f32.mrf.mxu0
        %v371 = vadd.f32 %v271, %v370
        %v372 = vpop.f32.mrf.mxu0
        %v373 = vadd.f32 %v271, %v372
        %374 = vmatmul.bf16.gmra.mxu0 %v335
        %v375 = vpop.f32.mrf.mxu0
        %v376 = vadd.f32 %v271, %v375
        %v377 = vpop.f32.mrf.mxu0
        %v378 = vadd.f32 %v271, %v377
        %379 = vdwg.mxu0
        %v380 = vmax.f32 %v351, 0.0
        %v381 = vmax.f32 %v353, 0.0
        %v382 = vmax.f32 %v356, 0.0
        %v383 = vmax.f32 %v358, 0.0
        %v384 = vmax.f32 %v361, 0.0
        %v385 = vmax.f32 %v363, 0.0
        %v386 = vmax.f32 %v366, 0.0
        %v387 = vmax.f32 %v368, 0.0
        %v388 = vmax.f32 %v371, 0.0
        %v389 = vmax.f32 %v373, 0.0
        %v390 = vmax.f32 %v376, 0.0
        %v391 = vmax.f32 %v378, 0.0
        %v392 = vpack.c.bf16 %v380, %v380
        %v393 = vpack.c.bf16 %v381, %v381
        %v394 = vpack.c.bf16 %v382, %v382
        %v395 = vpack.c.bf16 %v383, %v383
        %v396 = vpack.c.bf16 %v384, %v384
        %v397 = vpack.c.bf16 %v385, %v385
        %v398 = vpack.c.bf16 %v386, %v386
        %v399 = vpack.c.bf16 %v387, %v387
        %v400 = vpack.c.bf16 %v388, %v388
        %v401 = vpack.c.bf16 %v389, %v389
        %v402 = vpack.c.bf16 %v390, %v390
        %v403 = vpack.c.bf16 %v391, %v391
        %vm404 = vsmask.f32 256
        %vm405 = vsmask.f32 4368
        %vm406 = vmor %vm404, %vm405
        %v408 = vshrl.u32 %v392, 16
        %v410 = vrot.slane %v408, 7
        %v411 = vshll.u32 %v392, 16
        %v413 = vor.u32 %v410, %v411
        %v414 = vrot.slane %v410, 4
        %v416 = vshrl.u32 %v393, 16
        %v418 = vrot.slane %v416, 7
        %v419 = vshll.u32 %v393, 16
        %v421 = vor.u32 %v418, %v419
        %v422 = vsel %vm406, %v414, %v421
        %v424 = vshrl.u32 %v394, 16
        %v426 = vrot.slane %v424, 7
        %v427 = vshll.u32 %v394, 16
        %v429 = vor.u32 %v426, %v427
        %v430 = vrot.slane %v426, 4
        %v432 = vshrl.u32 %v395, 16
        %v434 = vrot.slane %v432, 7
        %v435 = vshll.u32 %v395, 16
        %v437 = vor.u32 %v434, %v435
        %v438 = vsel %vm406, %v430, %v437
        %v440 = vshrl.u32 %v396, 16
        %v442 = vrot.slane %v440, 7
        %v443 = vshll.u32 %v396, 16
        %v445 = vor.u32 %v442, %v443
        %v446 = vrot.slane %v442, 4
        %v448 = vshrl.u32 %v397, 16
        %v450 = vrot.slane %v448, 7
        %v451 = vshll.u32 %v397, 16
        %v453 = vor.u32 %v450, %v451
        %v454 = vsel %vm406, %v446, %v453
        %v456 = vshrl.u32 %v398, 16
        %v458 = vrot.slane %v456, 7
        %v459 = vshll.u32 %v398, 16
        %v461 = vor.u32 %v458, %v459
        %v462 = vrot.slane %v458, 4
        %v464 = vshrl.u32 %v399, 16
        %v466 = vrot.slane %v464, 7
        %v467 = vshll.u32 %v399, 16
        %v469 = vor.u32 %v466, %v467
        %v470 = vsel %vm406, %v462, %v469
        %v472 = vshrl.u32 %v400, 16
        %v474 = vrot.slane %v472, 7
        %v475 = vshll.u32 %v400, 16
        %v477 = vor.u32 %v474, %v475
        %v478 = vrot.slane %v474, 4
        %v480 = vshrl.u32 %v401, 16
        %v482 = vrot.slane %v480, 7
        %v483 = vshll.u32 %v401, 16
        %v485 = vor.u32 %v482, %v483
        %v486 = vsel %vm406, %v478, %v485
        %v488 = vshrl.u32 %v402, 16
        %v490 = vrot.slane %v488, 7
        %v491 = vshll.u32 %v402, 16
        %v493 = vor.u32 %v490, %v491
        %v494 = vrot.slane %v490, 4
        %v496 = vshrl.u32 %v403, 16
        %v498 = vrot.slane %v496, 7
        %v499 = vshll.u32 %v403, 16
        %v501 = vor.u32 %v498, %v499
        %v502 = vsel %vm406, %v494, %v501
        %vm515 = vcmask 519168
        %vm516 = vsmask.f32 7938
        %vm517 = vmand %vm515, %vm516
        %v518 = vld [vmem:[#allocation2] sm:$0xf]
        %v519 = vsel %vm517, %v413, %v518
        %520 = vst [vmem:[#allocation2] sm:$0xf] %v519
        %vm521 = vcmask 519168
        %522 = vst.msk [vmem:[#allocation2 + $0x8] sm:$0xf] %vm521, %v422
        %v523 = vld [vmem:[#allocation2 + $0x10] sm:$0xf]
        %v524 = vsel %vm517, %v429, %v523
        %525 = vst [vmem:[#allocation2 + $0x10] sm:$0xf] %v524
        %526 = vst.msk [vmem:[#allocation2 + $0x18] sm:$0xf] %vm521, %v438
        %v527 = vld [vmem:[#allocation2 + $0x20] sm:$0xf]
        %v528 = vsel %vm517, %v445, %v527
        %529 = vst [vmem:[#allocation2 + $0x20] sm:$0xf] %v528
        %530 = vst.msk [vmem:[#allocation2 + $0x28] sm:$0xf] %vm521, %v454
        %v531 = vld [vmem:[#allocation2 + $0x30] sm:$0xf]
        %v532 = vsel %vm517, %v461, %v531
        %533 = vst [vmem:[#allocation2 + $0x30] sm:$0xf] %v532
        %534 = vst.msk [vmem:[#allocation2 + $0x38] sm:$0xf] %vm521, %v470
        %v535 = vld [vmem:[#allocation2 + $0x40] sm:$0xf]
        %v536 = vsel %vm517, %v477, %v535
        %537 = vst [vmem:[#allocation2 + $0x40] sm:$0xf] %v536
        %538 = vst.msk [vmem:[#allocation2 + $0x48] sm:$0xf] %vm521, %v486
        %v539 = vld [vmem:[#allocation2 + $0x50] sm:$0xf]
        %v540 = vsel %vm517, %v493, %v539
        %541 = vst [vmem:[#allocation2 + $0x50] sm:$0xf] %v540
        %542 = vst.msk [vmem:[#allocation2 + $0x58] sm:$0xf] %vm521, %v502
        %555 = vrot.lane.b32.xlu0 %v392, 64
        %v556 = vpop.permute.xlu0 %555
        %557 = vrot.lane.b32.xlu0 %v393, 64
        %v558 = vpop.permute.xlu0 %557
        %559 = vrot.lane.b32.xlu0 %v394, 64
        %v560 = vpop.permute.xlu0 %559
        %561 = vrot.lane.b32.xlu0 %v395, 64
        %v562 = vpop.permute.xlu0 %561
        %563 = vrot.lane.b32.xlu0 %v396, 64
        %v564 = vpop.permute.xlu0 %563
        %565 = vrot.lane.b32.xlu0 %v397, 64
        %v566 = vpop.permute.xlu0 %565
        %567 = vrot.lane.b32.xlu0 %v398, 64
        %v568 = vpop.permute.xlu0 %567
        %569 = vrot.lane.b32.xlu0 %v399, 64
        %v570 = vpop.permute.xlu0 %569
        %571 = vrot.lane.b32.xlu0 %v400, 64
        %v572 = vpop.permute.xlu0 %571
        %573 = vrot.lane.b32.xlu0 %v401, 64
        %v574 = vpop.permute.xlu0 %573
        %575 = vrot.lane.b32.xlu0 %v402, 64
        %v576 = vpop.permute.xlu0 %575
        %577 = vrot.lane.b32.xlu0 %v403, 64
        %v578 = vpop.permute.xlu0 %577
        %vm591 = vcmask 1043968
        %592 = vst.msk [vmem:[#allocation2] sm:$0xf] %vm591, %v556
        %593 = vst.msk [vmem:[#allocation2 + $0x8] sm:$0xf] %vm591, %v558
        %594 = vst.msk [vmem:[#allocation2 + $0x10] sm:$0xf] %vm591, %v560
        %595 = vst.msk [vmem:[#allocation2 + $0x18] sm:$0xf] %vm591, %v562
        %596 = vst.msk [vmem:[#allocation2 + $0x20] sm:$0xf] %vm591, %v564
        %597 = vst.msk [vmem:[#allocation2 + $0x28] sm:$0xf] %vm591, %v566
        %598 = vst.msk [vmem:[#allocation2 + $0x30] sm:$0xf] %vm591, %v568
        %599 = vst.msk [vmem:[#allocation2 + $0x38] sm:$0xf] %vm591, %v570
        %600 = vst.msk [vmem:[#allocation2 + $0x40] sm:$0xf] %vm591, %v572
        %601 = vst.msk [vmem:[#allocation2 + $0x48] sm:$0xf] %vm591, %v574
        %602 = vst.msk [vmem:[#allocation2 + $0x50] sm:$0xf] %vm591, %v576
        %603 = vst.msk [vmem:[#allocation2 + $0x58] sm:$0xf] %vm591, %v578
        %vm604 = vsmask.f32 3328
        %vm605 = vsmask.f32 7440
        %vm606 = vmor %vm604, %vm605
        %v607 = vrot.slane %v408, 4
        %v608 = vrot.slane %v411, 5
        %v609 = vor.u32 %v607, %v608
        %v610 = vrot.slane %v609, 4
        %v611 = vrot.slane %v419, 5
        %v612 = vsel %vm606, %v610, %v611
        %v613 = vrot.slane %v416, 4
        %v614 = vor.u32 %v613, %v611
        %v615 = vrot.slane %v614, 4
        %v616 = vrot.slane %v424, 4
        %v617 = vrot.slane %v427, 5
        %v618 = vor.u32 %v616, %v617
        %v619 = vrot.slane %v618, 4
        %v620 = vrot.slane %v435, 5
        %v621 = vsel %vm606, %v619, %v620
        %v622 = vrot.slane %v432, 4
        %v623 = vor.u32 %v622, %v620
        %v624 = vrot.slane %v623, 4
        %v625 = vrot.slane %v440, 4
        %v626 = vrot.slane %v443, 5
        %v627 = vor.u32 %v625, %v626
        %v628 = vrot.slane %v627, 4
        %v629 = vrot.slane %v451, 5
        %v630 = vsel %vm606, %v628, %v629
        %v631 = vrot.slane %v448, 4
        %v632 = vor.u32 %v631, %v629
        %v633 = vrot.slane %v632, 4
        %v634 = vrot.slane %v456, 4
        %v635 = vrot.slane %v459, 5
        %v636 = vor.u32 %v634, %v635
        %v637 = vrot.slane %v636, 4
        %v638 = vrot.slane %v467, 5
        %v639 = vsel %vm606, %v637, %v638
        %v640 = vrot.slane %v464, 4
        %v641 = vor.u32 %v640, %v638
        %v642 = vrot.slane %v641, 4
        %v643 = vrot.slane %v472, 4
        %v644 = vrot.slane %v475, 5
        %v645 = vor.u32 %v643, %v644
        %v646 = vrot.slane %v645, 4
        %v647 = vrot.slane %v483, 5
        %v648 = vsel %vm606, %v646, %v647
        %v649 = vrot.slane %v480, 4
        %v650 = vor.u32 %v649, %v647
        %v651 = vrot.slane %v650, 4
        %v652 = vrot.slane %v488, 4
        %v653 = vrot.slane %v491, 5
        %v654 = vor.u32 %v652, %v653
        %v655 = vrot.slane %v654, 4
        %v656 = vrot.slane %v499, 5
        %v657 = vsel %vm606, %v655, %v656
        %v658 = vrot.slane %v496, 4
        %v659 = vor.u32 %v658, %v656
        %v660 = vrot.slane %v659, 4
        %673 = vst.msk [vmem:[#allocation2 + $0x4] sm:$0xf] %vm521, %v612
        %vm674 = vmand %vm515, %vm604
        %v675 = vld [vmem:[#allocation2 + $0xc] sm:$0xf]
        %v676 = vsel %vm674, %v615, %v675
        %677 = vst [vmem:[#allocation2 + $0xc] sm:$0xf] %v676
        %678 = vst.msk [vmem:[#allocation2 + $0x14] sm:$0xf] %vm521, %v621
        %v679 = vld [vmem:[#allocation2 + $0x1c] sm:$0xf]
        %v680 = vsel %vm674, %v624, %v679
        %681 = vst [vmem:[#allocation2 + $0x1c] sm:$0xf] %v680
        %682 = vst.msk [vmem:[#allocation2 + $0x24] sm:$0xf] %vm521, %v630
        %v683 = vld [vmem:[#allocation2 + $0x2c] sm:$0xf]
        %v684 = vsel %vm674, %v633, %v683
        %685 = vst [vmem:[#allocation2 + $0x2c] sm:$0xf] %v684
        %686 = vst.msk [vmem:[#allocation2 + $0x34] sm:$0xf] %vm521, %v639
        %v687 = vld [vmem:[#allocation2 + $0x3c] sm:$0xf]
        %v688 = vsel %vm674, %v642, %v687
        %689 = vst [vmem:[#allocation2 + $0x3c] sm:$0xf] %v688
        %690 = vst.msk [vmem:[#allocation2 + $0x44] sm:$0xf] %vm521, %v648
        %v691 = vld [vmem:[#allocation2 + $0x4c] sm:$0xf]
        %v692 = vsel %vm674, %v651, %v691
        %693 = vst [vmem:[#allocation2 + $0x4c] sm:$0xf] %v692
        %694 = vst.msk [vmem:[#allocation2 + $0x54] sm:$0xf] %vm521, %v657
        %v695 = vld [vmem:[#allocation2 + $0x5c] sm:$0xf]
        %v696 = vsel %vm674, %v660, %v695
        %697 = vst [vmem:[#allocation2 + $0x5c] sm:$0xf] %v696
        %698 = vrot.lane.b32.xlu0 %v252, 64
        %v699 = vpop.permute.xlu0 %698
        %700 = vrot.lane.b32.xlu0 %v253, 64
        %v701 = vpop.permute.xlu0 %700
        %702 = vrot.lane.b32.xlu0 %v254, 64
        %v703 = vpop.permute.xlu0 %702
        %704 = vrot.lane.b32.xlu0 %v255, 64
        %v705 = vpop.permute.xlu0 %704
        %706 = vrot.lane.b32.xlu0 %v256, 64
        %v707 = vpop.permute.xlu0 %706
        %708 = vrot.lane.b32.xlu0 %v257, 64
        %v709 = vpop.permute.xlu0 %708
        %710 = vrot.lane.b32.xlu0 %v258, 64
        %v711 = vpop.permute.xlu0 %710
        %712 = vrot.lane.b32.xlu0 %v259, 64
        %v713 = vpop.permute.xlu0 %712
        %714 = vrot.lane.b32.xlu0 %v260, 64
        %v715 = vpop.permute.xlu0 %714
        %716 = vrot.lane.b32.xlu0 %v261, 64
        %v717 = vpop.permute.xlu0 %716
        %718 = vrot.lane.b32.xlu0 %v262, 64
        %v719 = vpop.permute.xlu0 %718
        %720 = vrot.lane.b32.xlu0 %v263, 64
        %v721 = vpop.permute.xlu0 %720
        %vm734 = vcmask 552448
        %735 = vst.msk [vmem:[#allocation2 + $0x4] sm:$0xf] %vm734, %v699
        %736 = vst.msk [vmem:[#allocation2 + $0xc] sm:$0xf] %vm734, %v701
        %737 = vst.msk [vmem:[#allocation2 + $0x14] sm:$0xf] %vm734, %v703
        %738 = vst.msk [vmem:[#allocation2 + $0x1c] sm:$0xf] %vm734, %v705
        %739 = vst.msk [vmem:[#allocation2 + $0x24] sm:$0xf] %vm734, %v707
        %740 = vst.msk [vmem:[#allocation2 + $0x2c] sm:$0xf] %vm734, %v709
        %741 = vst.msk [vmem:[#allocation2 + $0x34] sm:$0xf] %vm734, %v711
        %742 = vst.msk [vmem:[#allocation2 + $0x3c] sm:$0xf] %vm734, %v713
        %743 = vst.msk [vmem:[#allocation2 + $0x44] sm:$0xf] %vm734, %v715
        %744 = vst.msk [vmem:[#allocation2 + $0x4c] sm:$0xf] %vm734, %v717
        %745 = vst.msk [vmem:[#allocation2 + $0x54] sm:$0xf] %vm734, %v719
        %746 = vst.msk [vmem:[#allocation2 + $0x5c] sm:$0xf] %vm734, %v721
        %vm747 = vcmask 516096
        %vm748 = vmand %vm747, %vm404
        %v749 = vld [vmem:[#allocation2] sm:$0x1]
        %v750 = vsel %vm748, 0, %v749
        %751 = vst [vmem:[#allocation2] sm:$0x1] %v750
        %v752 = vld [vmem:[#allocation2 + $0x10] sm:$0x1]
        %v753 = vsel %vm748, 0, %v752
        %754 = vst [vmem:[#allocation2 + $0x10] sm:$0x1] %v753
        %v755 = vld [vmem:[#allocation2 + $0x20] sm:$0x1]
        %v756 = vsel %vm748, 0, %v755
        %757 = vst [vmem:[#allocation2 + $0x20] sm:$0x1] %v756
        %v758 = vld [vmem:[#allocation2 + $0x30] sm:$0x1]
        %v759 = vsel %vm748, 0, %v758
        %760 = vst [vmem:[#allocation2 + $0x30] sm:$0x1] %v759
        %v761 = vld [vmem:[#allocation2 + $0x40] sm:$0x1]
        %v762 = vsel %vm748, 0, %v761
        %763 = vst [vmem:[#allocation2 + $0x40] sm:$0x1] %v762
        %v764 = vld [vmem:[#allocation2 + $0x50] sm:$0x1]
        %v765 = vsel %vm748, 0, %v764
        %766 = vst [vmem:[#allocation2 + $0x50] sm:$0x1] %v765
        %vm767 = vcmask 519171
        %vm768 = vsmask.f32 7950
        %vm769 = vmand %vm767, %vm768
        %v770 = vld [vmem:[#allocation2 + $0xc] sm:$0x8]
        %v771 = vsel %vm769, 0, %v770
        %772 = vst [vmem:[#allocation2 + $0xc] sm:$0x8] %v771
        %v773 = vld [vmem:[#allocation2 + $0x1c] sm:$0x8]
        %v774 = vsel %vm769, 0, %v773
        %775 = vst [vmem:[#allocation2 + $0x1c] sm:$0x8] %v774
        %v776 = vld [vmem:[#allocation2 + $0x2c] sm:$0x8]
        %v777 = vsel %vm769, 0, %v776
        %778 = vst [vmem:[#allocation2 + $0x2c] sm:$0x8] %v777
        %v779 = vld [vmem:[#allocation2 + $0x3c] sm:$0x8]
        %v780 = vsel %vm769, 0, %v779
        %781 = vst [vmem:[#allocation2 + $0x3c] sm:$0x8] %v780
        %v782 = vld [vmem:[#allocation2 + $0x4c] sm:$0x8]
        %v783 = vsel %vm769, 0, %v782
        %784 = vst [vmem:[#allocation2 + $0x4c] sm:$0x8] %v783
        %v785 = vld [vmem:[#allocation2 + $0x5c] sm:$0x8]
        %v786 = vsel %vm769, 0, %v785
        %787 = vst [vmem:[#allocation2 + $0x5c] sm:$0x8] %v786
        %p788 = scmp.eq.s32.totalorder %s24, 0
        // Predicated region
        $region41: #{resblock_pallas.1} parent=39 // pred_check
          %p789 = pneg %p788
        $region42: #{resblock_pallas.1} parent=39 // pred_check_branch
          %791 = sbr.rel (%p789) target = $region44
        $region43: #{resblock_pallas.1} parent=39 // pred_region
          %vm792 = vcmask 1043456
          %vm793 = vcmask 556036
          %vm794 = vmor %vm793, %vm792
          %795 = vst.msk [vmem:[#allocation2] sm:$0xff] %vm794, 0
          %796 = vst.msk [vmem:[#allocation2 + $0x8] sm:$0xff] %vm794, 0
        $region44: #{resblock_pallas.1} parent=39 // pred_fallthru
          _
        %p797 = scmp.eq.s32.totalorder %s24, 3
        // Predicated region
        $region45: #{resblock_pallas.1} parent=39 // pred_check
          %p798 = pneg %p797
        $region46: #{resblock_pallas.1} parent=39 // pred_check_branch
          %800 = sbr.rel (%p798) target = $region48
        $region47: #{resblock_pallas.1} parent=39 // pred_region
          %s801 = scalar_lea.vmem [#allocation2], 80
          %vm802 = vcmask 1043456
          %vm803 = vcmask 556036
          %vm804 = vmor %vm803, %vm802
          %805 = vst.msk [vmem:[%s801] sm:$0xff] %vm804, 0
          %806 = vst.msk [vmem:[%s801 + $0x8] sm:$0xff] %vm804, 0
        $region48: #{resblock_pallas.1} parent=39 // pred_fallthru
          _
        %v807 = vld [vmem:[#allocation2] sm:$0xff]
        %v808 = vld [vmem:[#allocation2 + $0x8] sm:$0xff]
        %v809 = vld [vmem:[#allocation2 + $0x10] sm:$0xff]
        %v810 = vld [vmem:[#allocation2 + $0x18] sm:$0xff]
        %v811 = vld [vmem:[#allocation2 + $0x20] sm:$0xff]
        %v812 = vld [vmem:[#allocation2 + $0x28] sm:$0xff]
        %v813 = vld [vmem:[#allocation2 + $0x30] sm:$0xff]
        %v814 = vld [vmem:[#allocation2 + $0x38] sm:$0xff]
        %v815 = vld [vmem:[%s3] sm:$0xf]
        %v816 = vld [vmem:[%s3 + $0x4] sm:$0xf]
        %v817 = vld [vmem:[%s3 + $0x8] sm:$0xf]
        %v818 = vld [vmem:[%s3 + $0xc] sm:$0xf]
        %v819 = vld [vmem:[%s3 + $0x10] sm:$0xf]
        %v820 = vld [vmem:[%s3 + $0x14] sm:$0xf]
        %v821 = vld [vmem:[%s3 + $0x18] sm:$0xf]
        %v822 = vld [vmem:[%s3 + $0x1c] sm:$0xf]
        %v823 = vld [vmem:[%s3 + $0x20] sm:$0xf]
        %v824 = vld [vmem:[%s3 + $0x24] sm:$0xf]
        %v825 = vld [vmem:[%s3 + $0x28] sm:$0xf]
        %v826 = vld [vmem:[%s3 + $0x2c] sm:$0xf]
        %v827 = vld [vmem:[%s3 + $0x30] sm:$0xf]
        %v828 = vld [vmem:[%s3 + $0x34] sm:$0xf]
        %v829 = vld [vmem:[%s3 + $0x38] sm:$0xf]
        %v830 = vld [vmem:[%s3 + $0x3c] sm:$0xf]
        %v831 = vld [vmem:[%s3 + $0x40] sm:$0xf]
        %v832 = vld [vmem:[%s3 + $0x44] sm:$0xf]
        %v833 = vld [vmem:[%s3 + $0x48] sm:$0xf]
        %v834 = vld [vmem:[%s3 + $0x4c] sm:$0xf]
        %v835 = vld [vmem:[%s3 + $0x50] sm:$0xf]
        %v836 = vld [vmem:[%s3 + $0x54] sm:$0xf]
        %v837 = vld [vmem:[%s3 + $0x58] sm:$0xf]
        %v838 = vld [vmem:[%s3 + $0x5c] sm:$0xf]
        %v839 = vld [vmem:[%s3 + $0x60] sm:$0x3]
        %s840 = scalar_lea.vmem [#allocation2], 16
        %v841 = vld [vmem:[%s840] sm:$0xff]
        %v842 = vld [vmem:[%s840 + $0x8] sm:$0xff]
        %v843 = vld [vmem:[%s840 + $0x10] sm:$0xff]
        %v844 = vld [vmem:[%s840 + $0x18] sm:$0xff]
        %v845 = vld [vmem:[%s840 + $0x20] sm:$0xff]
        %v846 = vld [vmem:[%s840 + $0x28] sm:$0xff]
        %v847 = vld [vmem:[%s840 + $0x30] sm:$0xff]
        %v848 = vld [vmem:[%s840 + $0x38] sm:$0xff]
        %s849 = scalar_lea.vmem %s3, 100
        %v850 = vld [vmem:[%s849] sm:$0xf]
        %v851 = vld [vmem:[%s849 + $0x4] sm:$0xf]
        %v852 = vld [vmem:[%s849 + $0x8] sm:$0xf]
        %v853 = vld [vmem:[%s849 + $0xc] sm:$0xf]
        %v854 = vld [vmem:[%s849 + $0x10] sm:$0xf]
        %v855 = vld [vmem:[%s849 + $0x14] sm:$0xf]
        %v856 = vld [vmem:[%s849 + $0x18] sm:$0xf]
        %v857 = vld [vmem:[%s849 + $0x1c] sm:$0xf]
        %v858 = vld [vmem:[%s849 + $0x20] sm:$0xf]
        %v859 = vld [vmem:[%s849 + $0x24] sm:$0xf]
        %v860 = vld [vmem:[%s849 + $0x28] sm:$0xf]
        %v861 = vld [vmem:[%s849 + $0x2c] sm:$0xf]
        %v862 = vld [vmem:[%s849 + $0x30] sm:$0xf]
        %v863 = vld [vmem:[%s849 + $0x34] sm:$0xf]
        %v864 = vld [vmem:[%s849 + $0x38] sm:$0xf]
        %v865 = vld [vmem:[%s849 + $0x3c] sm:$0xf]
        %v866 = vld [vmem:[%s849 + $0x40] sm:$0xf]
        %v867 = vld [vmem:[%s849 + $0x44] sm:$0xf]
        %v868 = vld [vmem:[%s849 + $0x48] sm:$0xf]
        %v869 = vld [vmem:[%s849 + $0x4c] sm:$0xf]
        %v870 = vld [vmem:[%s849 + $0x50] sm:$0xf]
        %v871 = vld [vmem:[%s849 + $0x54] sm:$0xf]
        %v872 = vld [vmem:[%s849 + $0x58] sm:$0xf]
        %v873 = vld [vmem:[%s849 + $0x5c] sm:$0xf]
        %v874 = vld [vmem:[%s849 + $0x60] sm:$0x3]
        %v883 = vunpack.c.l.b16 %v841
        %v884 = vunpack.c.h.b16 %v841
        %v885 = vunpack.c.l.b16 %v842
        %v886 = vunpack.c.h.b16 %v842
        %v887 = vunpack.c.l.b16 %v843
        %v888 = vunpack.c.h.b16 %v843
        %v889 = vunpack.c.l.b16 %v844
        %v890 = vunpack.c.h.b16 %v844
        %v891 = vunpack.c.l.b16 %v845
        %v892 = vunpack.c.h.b16 %v845
        %v893 = vunpack.c.l.b16 %v846
        %v894 = vunpack.c.h.b16 %v846
        %v895 = vunpack.c.l.b16 %v847
        %v896 = vunpack.c.h.b16 %v847
        %v897 = vunpack.c.l.b16 %v848
        %v898 = vunpack.c.h.b16 %v848
        %v899 = vpack.c.b16 %v885, %v883
        %v900 = vpack.c.b16 %v886, %v884
        %v901 = vpack.c.b16 %v889, %v887
        %v902 = vpack.c.b16 %v890, %v888
        %v903 = vpack.c.b16 %v893, %v891
        %v904 = vpack.c.b16 %v894, %v892
        %v905 = vpack.c.b16 %v897, %v895
        %v906 = vpack.c.b16 %v898, %v896
        %v936 = vunpack.c.l.b16 %v850
        %v937 = vunpack.c.l.b16 %v851
        %v938 = vunpack.c.l.b16 %v852
        %v939 = vunpack.c.l.b16 %v853
        %v940 = vunpack.c.l.b16 %v854
        %v941 = vunpack.c.l.b16 %v855
        %v942 = vunpack.c.l.b16 %v856
        %v943 = vunpack.c.l.b16 %v857
        %v944 = vunpack.c.l.b16 %v858
        %v945 = vunpack.c.l.b16 %v859
        %v946 = vunpack.c.l.b16 %v860
        %v947 = vunpack.c.l.b16 %v861
        %v948 = vunpack.c.l.b16 %v862
        %v949 = vunpack.c.l.b16 %v863
        %v950 = vunpack.c.l.b16 %v864
        %v951 = vunpack.c.l.b16 %v865
        %v952 = vunpack.c.l.b16 %v866
        %v953 = vunpack.c.l.b16 %v867
        %v954 = vunpack.c.l.b16 %v868
        %v955 = vunpack.c.l.b16 %v869
        %v956 = vunpack.c.l.b16 %v870
        %v957 = vunpack.c.l.b16 %v871
        %v958 = vunpack.c.l.b16 %v872
        %v959 = vunpack.c.l.b16 %v873
        %v960 = vunpack.c.l.b16 %v874
        %v961 = vpack.c.b16 %v937, %v936
        %v962 = vpack.c.b16 %v939, %v938
        %v963 = vpack.c.b16 %v941, %v940
        %v964 = vpack.c.b16 %v943, %v942
        %v965 = vpack.c.b16 %v945, %v944
        %v966 = vpack.c.b16 %v947, %v946
        %v967 = vpack.c.b16 %v949, %v948
        %v968 = vpack.c.b16 %v951, %v950
        %v969 = vpack.c.b16 %v953, %v952
        %v970 = vpack.c.b16 %v955, %v954
        %v971 = vpack.c.b16 %v957, %v956
        %v972 = vpack.c.b16 %v959, %v958
        %v973 = vpack.c.b16 %v960, %v960
        %vm986 = vcmask 556032
        %v988 = vsel %vm986, %v900, 0
        %v991 = vsel %vm986, %v902, 0
        %v994 = vsel %vm986, %v904, 0
        %v997 = vsel %vm986, %v906, 0
        %v1000 = vsel %vm337, %v973, 0
        %1002 = vmatpush.bf16.msra.mxu0 %v968
        %1003 = vmatpush.bf16.msra.mxu0 %v967
        %1004 = vmatpush.bf16.msra.mxu0 %v966
        %1005 = vmatpush.bf16.msra.mxu0 %v965
        %1006 = vmatpush.bf16.msra.mxu0 %v964
        %1007 = vmatpush.bf16.msra.mxu0 %v963
        %1008 = vmatpush.bf16.msra.mxu0 %v962
        %1009 = vmatpush.bf16.msra.mxu0 %v961
        %1010 = vmatmul.bf16.gmra.mxu0 %v899
        %v1011 = vpop.f32.mrf.mxu0
        %v1012 = vadd.f32 0.0, %v1011
        %v1013 = vpop.f32.mrf.mxu0
        %v1014 = vadd.f32 0.0, %v1013
        %1015 = vmatmul.bf16.gmra.mxu0 %v901
        %v1016 = vpop.f32.mrf.mxu0
        %v1017 = vadd.f32 0.0, %v1016
        %v1018 = vpop.f32.mrf.mxu0
        %v1019 = vadd.f32 0.0, %v1018
        %1020 = vmatmul.bf16.gmra.mxu0 %v903
        %v1021 = vpop.f32.mrf.mxu0
        %v1022 = vadd.f32 0.0, %v1021
        %v1023 = vpop.f32.mrf.mxu0
        %v1024 = vadd.f32 0.0, %v1023
        %1025 = vmatmul.bf16.gmra.mxu0 %v905
        %v1026 = vpop.f32.mrf.mxu0
        %v1027 = vadd.f32 0.0, %v1026
        %v1028 = vpop.f32.mrf.mxu0
        %v1029 = vadd.f32 0.0, %v1028
        %1030 = vdwg.mxu0
        %1031 = vmatpush.bf16.msra.mxu0 0
        %1032 = vmatpush.bf16.msra.mxu0 0
        %1033 = vmatpush.bf16.msra.mxu0 0
        %1034 = vmatpush.bf16.msra.mxu0 %v1000
        %1035 = vmatpush.bf16.msra.mxu0 %v972
        %1036 = vmatpush.bf16.msra.mxu0 %v971
        %1037 = vmatpush.bf16.msra.mxu0 %v970
        %1038 = vmatpush.bf16.msra.mxu0 %v969
        %1039 = vmatmul.bf16.gmra.mxu0 %v988
        %v1040 = vpop.f32.mrf.mxu0
        %v1041 = vadd.f32 %v1012, %v1040
        %v1042 = vpop.f32.mrf.mxu0
        %v1043 = vadd.f32 %v1014, %v1042
        %1044 = vmatmul.bf16.gmra.mxu0 %v991
        %v1045 = vpop.f32.mrf.mxu0
        %v1046 = vadd.f32 %v1017, %v1045
        %v1047 = vpop.f32.mrf.mxu0
        %v1048 = vadd.f32 %v1019, %v1047
        %1049 = vmatmul.bf16.gmra.mxu0 %v994
        %v1050 = vpop.f32.mrf.mxu0
        %v1051 = vadd.f32 %v1022, %v1050
        %v1052 = vpop.f32.mrf.mxu0
        %v1053 = vadd.f32 %v1024, %v1052
        %1054 = vmatmul.bf16.gmra.mxu0 %v997
        %v1055 = vpop.f32.mrf.mxu0
        %v1056 = vadd.f32 %v1027, %v1055
        %v1057 = vpop.f32.mrf.mxu0
        %v1058 = vadd.f32 %v1029, %v1057
        %1059 = vdwg.mxu0
        %v1068 = vunpack.c.l.b16 %v807
        %v1069 = vunpack.c.h.b16 %v807
        %v1070 = vunpack.c.l.b16 %v808
        %v1071 = vunpack.c.h.b16 %v808
        %v1072 = vunpack.c.l.b16 %v809
        %v1073 = vunpack.c.h.b16 %v809
        %v1074 = vunpack.c.l.b16 %v810
        %v1075 = vunpack.c.h.b16 %v810
        %v1076 = vunpack.c.l.b16 %v811
        %v1077 = vunpack.c.h.b16 %v811
        %v1078 = vunpack.c.l.b16 %v812
        %v1079 = vunpack.c.h.b16 %v812
        %v1080 = vunpack.c.l.b16 %v813
        %v1081 = vunpack.c.h.b16 %v813
        %v1082 = vunpack.c.l.b16 %v814
        %v1083 = vunpack.c.h.b16 %v814
        %v1084 = vpack.c.b16 %v1070, %v1068
        %v1085 = vpack.c.b16 %v1071, %v1069
        %v1086 = vpack.c.b16 %v1074, %v1072
        %v1087 = vpack.c.b16 %v1075, %v1073
        %v1088 = vpack.c.b16 %v1078, %v1076
        %v1089 = vpack.c.b16 %v1079, %v1077
        %v1090 = vpack.c.b16 %v1082, %v1080
        %v1091 = vpack.c.b16 %v1083, %v1081
        %v1121 = vunpack.c.l.b16 %v815
        %v1122 = vunpack.c.l.b16 %v816
        %v1123 = vunpack.c.l.b16 %v817
        %v1124 = vunpack.c.l.b16 %v818
        %v1125 = vunpack.c.l.b16 %v819
        %v1126 = vunpack.c.l.b16 %v820
        %v1127 = vunpack.c.l.b16 %v821
        %v1128 = vunpack.c.l.b16 %v822
        %v1129 = vunpack.c.l.b16 %v823
        %v1130 = vunpack.c.l.b16 %v824
        %v1131 = vunpack.c.l.b16 %v825
        %v1132 = vunpack.c.l.b16 %v826
        %v1133 = vunpack.c.l.b16 %v827
        %v1134 = vunpack.c.l.b16 %v828
        %v1135 = vunpack.c.l.b16 %v829
        %v1136 = vunpack.c.l.b16 %v830
        %v1137 = vunpack.c.l.b16 %v831
        %v1138 = vunpack.c.l.b16 %v832
        %v1139 = vunpack.c.l.b16 %v833
        %v1140 = vunpack.c.l.b16 %v834
        %v1141 = vunpack.c.l.b16 %v835
        %v1142 = vunpack.c.l.b16 %v836
        %v1143 = vunpack.c.l.b16 %v837
        %v1144 = vunpack.c.l.b16 %v838
        %v1145 = vunpack.c.l.b16 %v839
        %v1146 = vpack.c.b16 %v1122, %v1121
        %v1147 = vpack.c.b16 %v1124, %v1123
        %v1148 = vpack.c.b16 %v1126, %v1125
        %v1149 = vpack.c.b16 %v1128, %v1127
        %v1150 = vpack.c.b16 %v1130, %v1129
        %v1151 = vpack.c.b16 %v1132, %v1131
        %v1152 = vpack.c.b16 %v1134, %v1133
        %v1153 = vpack.c.b16 %v1136, %v1135
        %v1154 = vpack.c.b16 %v1138, %v1137
        %v1155 = vpack.c.b16 %v1140, %v1139
        %v1156 = vpack.c.b16 %v1142, %v1141
        %v1157 = vpack.c.b16 %v1144, %v1143
        %v1158 = vpack.c.b16 %v1145, %v1145
        %v1172 = vsel %vm986, %v1085, 0
        %v1175 = vsel %vm986, %v1087, 0
        %v1178 = vsel %vm986, %v1089, 0
        %v1181 = vsel %vm986, %v1091, 0
        %v1184 = vsel %vm337, %v1158, 0
        %1186 = vmatpush.bf16.msra.mxu0 %v1153
        %1187 = vmatpush.bf16.msra.mxu0 %v1152
        %1188 = vmatpush.bf16.msra.mxu0 %v1151
        %1189 = vmatpush.bf16.msra.mxu0 %v1150
        %1190 = vmatpush.bf16.msra.mxu0 %v1149
        %1191 = vmatpush.bf16.msra.mxu0 %v1148
        %1192 = vmatpush.bf16.msra.mxu0 %v1147
        %1193 = vmatpush.bf16.msra.mxu0 %v1146
        %1194 = vmatmul.bf16.gmra.mxu0 %v1084
        %v1195 = vpop.f32.mrf.mxu0
        %v1196 = vadd.f32 %v1041, %v1195
        %v1197 = vpop.f32.mrf.mxu0
        %v1198 = vadd.f32 %v1043, %v1197
        %1199 = vmatmul.bf16.gmra.mxu0 %v1086
        %v1200 = vpop.f32.mrf.mxu0
        %v1201 = vadd.f32 %v1046, %v1200
        %v1202 = vpop.f32.mrf.mxu0
        %v1203 = vadd.f32 %v1048, %v1202
        %1204 = vmatmul.bf16.gmra.mxu0 %v1088
        %v1205 = vpop.f32.mrf.mxu0
        %v1206 = vadd.f32 %v1051, %v1205
        %v1207 = vpop.f32.mrf.mxu0
        %v1208 = vadd.f32 %v1053, %v1207
        %1209 = vmatmul.bf16.gmra.mxu0 %v1090
        %v1210 = vpop.f32.mrf.mxu0
        %v1211 = vadd.f32 %v1056, %v1210
        %v1212 = vpop.f32.mrf.mxu0
        %v1213 = vadd.f32 %v1058, %v1212
        %1214 = vdwg.mxu0
        %1215 = vmatpush.bf16.msra.mxu0 0
        %1216 = vmatpush.bf16.msra.mxu0 0
        %1217 = vmatpush.bf16.msra.mxu0 0
        %1218 = vmatpush.bf16.msra.mxu0 %v1184
        %1219 = vmatpush.bf16.msra.mxu0 %v1157
        %1220 = vmatpush.bf16.msra.mxu0 %v1156
        %1221 = vmatpush.bf16.msra.mxu0 %v1155
        %1222 = vmatpush.bf16.msra.mxu0 %v1154
        %1223 = vmatmul.bf16.gmra.mxu0 %v1172
        %v1224 = vpop.f32.mrf.mxu0
        %v1225 = vadd.f32 %v1196, %v1224
        %v1226 = vpop.f32.mrf.mxu0
        %v1227 = vadd.f32 %v1198, %v1226
        %1228 = vmatmul.bf16.gmra.mxu0 %v1175
        %v1229 = vpop.f32.mrf.mxu0
        %v1230 = vadd.f32 %v1201, %v1229
        %v1231 = vpop.f32.mrf.mxu0
        %v1232 = vadd.f32 %v1203, %v1231
        %1233 = vmatmul.bf16.gmra.mxu0 %v1178
        %v1234 = vpop.f32.mrf.mxu0
        %v1235 = vadd.f32 %v1206, %v1234
        %v1236 = vpop.f32.mrf.mxu0
        %v1237 = vadd.f32 %v1208, %v1236
        %1238 = vmatmul.bf16.gmra.mxu0 %v1181
        %v1239 = vpop.f32.mrf.mxu0
        %v1240 = vadd.f32 %v1211, %v1239
        %v1241 = vpop.f32.mrf.mxu0
        %v1242 = vadd.f32 %v1213, %v1241
        %1243 = vdwg.mxu0
        %s1244 = scalar_lea.vmem [#allocation2], 32
        %v1245 = vld [vmem:[%s1244] sm:$0xff]
        %v1246 = vld [vmem:[%s1244 + $0x8] sm:$0xff]
        %v1247 = vld [vmem:[%s1244 + $0x10] sm:$0xff]
        %v1248 = vld [vmem:[%s1244 + $0x18] sm:$0xff]
        %v1249 = vld [vmem:[%s1244 + $0x20] sm:$0xff]
        %v1250 = vld [vmem:[%s1244 + $0x28] sm:$0xff]
        %v1251 = vld [vmem:[%s1244 + $0x30] sm:$0xff]
        %v1252 = vld [vmem:[%s1244 + $0x38] sm:$0xff]
        %s1253 = scalar_lea.vmem %s3, 200
        %v1254 = vld [vmem:[%s1253] sm:$0xf]
        %v1255 = vld [vmem:[%s1253 + $0x4] sm:$0xf]
        %v1256 = vld [vmem:[%s1253 + $0x8] sm:$0xf]
        %v1257 = vld [vmem:[%s1253 + $0xc] sm:$0xf]
        %v1258 = vld [vmem:[%s1253 + $0x10] sm:$0xf]
        %v1259 = vld [vmem:[%s1253 + $0x14] sm:$0xf]
        %v1260 = vld [vmem:[%s1253 + $0x18] sm:$0xf]
        %v1261 = vld [vmem:[%s1253 + $0x1c] sm:$0xf]
        %v1262 = vld [vmem:[%s1253 + $0x20] sm:$0xf]
        %v1263 = vld [vmem:[%s1253 + $0x24] sm:$0xf]
        %v1264 = vld [vmem:[%s1253 + $0x28] sm:$0xf]
        %v1265 = vld [vmem:[%s1253 + $0x2c] sm:$0xf]
        %v1266 = vld [vmem:[%s1253 + $0x30] sm:$0xf]
        %v1267 = vld [vmem:[%s1253 + $0x34] sm:$0xf]
        %v1268 = vld [vmem:[%s1253 + $0x38] sm:$0xf]
        %v1269 = vld [vmem:[%s1253 + $0x3c] sm:$0xf]
        %v1270 = vld [vmem:[%s1253 + $0x40] sm:$0xf]
        %v1271 = vld [vmem:[%s1253 + $0x44] sm:$0xf]
        %v1272 = vld [vmem:[%s1253 + $0x48] sm:$0xf]
        %v1273 = vld [vmem:[%s1253 + $0x4c] sm:$0xf]
        %v1274 = vld [vmem:[%s1253 + $0x50] sm:$0xf]
        %v1275 = vld [vmem:[%s1253 + $0x54] sm:$0xf]
        %v1276 = vld [vmem:[%s1253 + $0x58] sm:$0xf]
        %v1277 = vld [vmem:[%s1253 + $0x5c] sm:$0xf]
        %v1278 = vld [vmem:[%s1253 + $0x60] sm:$0x3]
        %v1287 = vunpack.c.l.b16 %v1245
        %v1288 = vunpack.c.h.b16 %v1245
        %v1289 = vunpack.c.l.b16 %v1246
        %v1290 = vunpack.c.h.b16 %v1246
        %v1291 = vunpack.c.l.b16 %v1247
        %v1292 = vunpack.c.h.b16 %v1247
        %v1293 = vunpack.c.l.b16 %v1248
        %v1294 = vunpack.c.h.b16 %v1248
        %v1295 = vunpack.c.l.b16 %v1249
        %v1296 = vunpack.c.h.b16 %v1249
        %v1297 = vunpack.c.l.b16 %v1250
        %v1298 = vunpack.c.h.b16 %v1250
        %v1299 = vunpack.c.l.b16 %v1251
        %v1300 = vunpack.c.h.b16 %v1251
        %v1301 = vunpack.c.l.b16 %v1252
        %v1302 = vunpack.c.h.b16 %v1252
        %v1303 = vpack.c.b16 %v1289, %v1287
        %v1304 = vpack.c.b16 %v1290, %v1288
        %v1305 = vpack.c.b16 %v1293, %v1291
        %v1306 = vpack.c.b16 %v1294, %v1292
        %v1307 = vpack.c.b16 %v1297, %v1295
        %v1308 = vpack.c.b16 %v1298, %v1296
        %v1309 = vpack.c.b16 %v1301, %v1299
        %v1310 = vpack.c.b16 %v1302, %v1300
        %v1340 = vunpack.c.l.b16 %v1254
        %v1341 = vunpack.c.l.b16 %v1255
        %v1342 = vunpack.c.l.b16 %v1256
        %v1343 = vunpack.c.l.b16 %v1257
        %v1344 = vunpack.c.l.b16 %v1258
        %v1345 = vunpack.c.l.b16 %v1259
        %v1346 = vunpack.c.l.b16 %v1260
        %v1347 = vunpack.c.l.b16 %v1261
        %v1348 = vunpack.c.l.b16 %v1262
        %v1349 = vunpack.c.l.b16 %v1263
        %v1350 = vunpack.c.l.b16 %v1264
        %v1351 = vunpack.c.l.b16 %v1265
        %v1352 = vunpack.c.l.b16 %v1266
        %v1353 = vunpack.c.l.b16 %v1267
        %v1354 = vunpack.c.l.b16 %v1268
        %v1355 = vunpack.c.l.b16 %v1269
        %v1356 = vunpack.c.l.b16 %v1270
        %v1357 = vunpack.c.l.b16 %v1271
        %v1358 = vunpack.c.l.b16 %v1272
        %v1359 = vunpack.c.l.b16 %v1273
        %v1360 = vunpack.c.l.b16 %v1274
        %v1361 = vunpack.c.l.b16 %v1275
        %v1362 = vunpack.c.l.b16 %v1276
        %v1363 = vunpack.c.l.b16 %v1277
        %v1364 = vunpack.c.l.b16 %v1278
        %v1365 = vpack.c.b16 %v1341, %v1340
        %v1366 = vpack.c.b16 %v1343, %v1342
        %v1367 = vpack.c.b16 %v1345, %v1344
        %v1368 = vpack.c.b16 %v1347, %v1346
        %v1369 = vpack.c.b16 %v1349, %v1348
        %v1370 = vpack.c.b16 %v1351, %v1350
        %v1371 = vpack.c.b16 %v1353, %v1352
        %v1372 = vpack.c.b16 %v1355, %v1354
        %v1373 = vpack.c.b16 %v1357, %v1356
        %v1374 = vpack.c.b16 %v1359, %v1358
        %v1375 = vpack.c.b16 %v1361, %v1360
        %v1376 = vpack.c.b16 %v1363, %v1362
        %v1377 = vpack.c.b16 %v1364, %v1364
        %v1391 = vsel %vm986, %v1304, 0
        %v1394 = vsel %vm986, %v1306, 0
        %v1397 = vsel %vm986, %v1308, 0
        %v1400 = vsel %vm986, %v1310, 0
        %v1403 = vsel %vm337, %v1377, 0
        %1405 = vmatpush.bf16.msra.mxu0 %v1372
        %1406 = vmatpush.bf16.msra.mxu0 %v1371
        %1407 = vmatpush.bf16.msra.mxu0 %v1370
        %1408 = vmatpush.bf16.msra.mxu0 %v1369
        %1409 = vmatpush.bf16.msra.mxu0 %v1368
        %1410 = vmatpush.bf16.msra.mxu0 %v1367
        %1411 = vmatpush.bf16.msra.mxu0 %v1366
        %1412 = vmatpush.bf16.msra.mxu0 %v1365
        %1413 = vmatmul.bf16.gmra.mxu0 %v1303
        %v1414 = vpop.f32.mrf.mxu0
        %v1415 = vadd.f32 0.0, %v1414
        %v1416 = vpop.f32.mrf.mxu0
        %v1417 = vadd.f32 0.0, %v1416
        %1418 = vmatmul.bf16.gmra.mxu0 %v1305
        %v1419 = vpop.f32.mrf.mxu0
        %v1420 = vadd.f32 0.0, %v1419
        %v1421 = vpop.f32.mrf.mxu0
        %v1422 = vadd.f32 0.0, %v1421
        %1423 = vmatmul.bf16.gmra.mxu0 %v1307
        %v1424 = vpop.f32.mrf.mxu0
        %v1425 = vadd.f32 0.0, %v1424
        %v1426 = vpop.f32.mrf.mxu0
        %v1427 = vadd.f32 0.0, %v1426
        %1428 = vmatmul.bf16.gmra.mxu0 %v1309
        %v1429 = vpop.f32.mrf.mxu0
        %v1430 = vadd.f32 0.0, %v1429
        %v1431 = vpop.f32.mrf.mxu0
        %v1432 = vadd.f32 0.0, %v1431
        %1433 = vdwg.mxu0
        %1434 = vmatpush.bf16.msra.mxu0 0
        %1435 = vmatpush.bf16.msra.mxu0 0
        %1436 = vmatpush.bf16.msra.mxu0 0
        %1437 = vmatpush.bf16.msra.mxu0 %v1403
        %1438 = vmatpush.bf16.msra.mxu0 %v1376
        %1439 = vmatpush.bf16.msra.mxu0 %v1375
        %1440 = vmatpush.bf16.msra.mxu0 %v1374
        %1441 = vmatpush.bf16.msra.mxu0 %v1373
        %1442 = vmatmul.bf16.gmra.mxu0 %v1391
        %v1443 = vpop.f32.mrf.mxu0
        %v1444 = vadd.f32 %v1415, %v1443
        %v1445 = vpop.f32.mrf.mxu0
        %v1446 = vadd.f32 %v1417, %v1445
        %1447 = vmatmul.bf16.gmra.mxu0 %v1394
        %v1448 = vpop.f32.mrf.mxu0
        %v1449 = vadd.f32 %v1420, %v1448
        %v1450 = vpop.f32.mrf.mxu0
        %v1451 = vadd.f32 %v1422, %v1450
        %1452 = vmatmul.bf16.gmra.mxu0 %v1397
        %v1453 = vpop.f32.mrf.mxu0
        %v1454 = vadd.f32 %v1425, %v1453
        %v1455 = vpop.f32.mrf.mxu0
        %v1456 = vadd.f32 %v1427, %v1455
        %1457 = vmatmul.bf16.gmra.mxu0 %v1400
        %v1458 = vpop.f32.mrf.mxu0
        %v1459 = vadd.f32 %v1430, %v1458
        %v1460 = vpop.f32.mrf.mxu0
        %v1461 = vadd.f32 %v1432, %v1460
        %1462 = vdwg.mxu0
        %v1463 = vadd.f32 %v1225, %v1444
        %v1464 = vadd.f32 %v1227, %v1446
        %v1465 = vadd.f32 %v1230, %v1449
        %v1466 = vadd.f32 %v1232, %v1451
        %v1467 = vadd.f32 %v1235, %v1454
        %v1468 = vadd.f32 %v1237, %v1456
        %v1469 = vadd.f32 %v1240, %v1459
        %v1470 = vadd.f32 %v1242, %v1461
        %v1471 = vld [vmem:[%s4] sm:$0x1]
        %v1473 = vperm.slane %v1471, 0
        %v1475 = vadd.f32 %v1463, %v1473
        %v1476 = vadd.f32 %v1464, %v1473
        %v1477 = vadd.f32 %v1465, %v1473
        %v1478 = vadd.f32 %v1466, %v1473
        %v1479 = vadd.f32 %v1467, %v1473
        %v1480 = vadd.f32 %v1468, %v1473
        %v1481 = vadd.f32 %v1469, %v1473
        %v1482 = vadd.f32 %v1470, %v1473
        %v1483 = vmax.f32 %v1475, 0.0
        %v1484 = vmax.f32 %v1476, 0.0
        %v1485 = vmax.f32 %v1477, 0.0
        %v1486 = vmax.f32 %v1478, 0.0
        %v1487 = vmax.f32 %v1479, 0.0
        %v1488 = vmax.f32 %v1480, 0.0
        %v1489 = vmax.f32 %v1481, 0.0
        %v1490 = vmax.f32 %v1482, 0.0
        %vm1491 = vcmask 523264
        %1492 = vst.msk [vmem:[%s241] sm:$0xff] %vm1491, %v1483
        %1493 = vst.msk [vmem:[%s241 + $0x8] sm:$0xff] %vm1491, %v1484
        %1494 = vst.msk [vmem:[%s241 + $0x10] sm:$0xff] %vm1491, %v1485
        %1495 = vst.msk [vmem:[%s241 + $0x18] sm:$0xff] %vm1491, %v1486
        %1496 = vst.msk [vmem:[%s241 + $0x20] sm:$0xff] %vm1491, %v1487
        %1497 = vst.msk [vmem:[%s241 + $0x28] sm:$0xff] %vm1491, %v1488
        %1498 = vst.msk [vmem:[%s241 + $0x30] sm:$0xff] %vm1491, %v1489
        %1499 = vst.msk [vmem:[%s241 + $0x38] sm:$0xff] %vm1491, %v1490
        %s1500 = sand.u32 %s153, 1
        %s1501 = scalar_lea.sflag [#allocation4], %s1500
        %s1502 = sand.u32 %s153, 1
        %s1503 = smul.addr %s1502, 64
        %s1504 = scalar_lea.vmem [#allocation3], %s1503
        // Predicated region
        $region49: #{resblock_pallas.1} parent=39 // pred_check
          %p1505 = pneg %p163
        $region50: #{resblock_pallas.1} parent=39 // pred_check_branch
          %1507 = sbr.rel (%p1505) target = $region52
        $region51: #{resblock_pallas.1} parent=39 // pred_region
          %1509 = vsyncadd %s1501, 0
          %s1510 = smul.addr %s24, 8
          %s1511 = smul.addr %s23, 32
          %s1512 = sadd.s32 %s1510, %s1511
          %s1513 = smul.addr %s1512, 8
          %s1514 = scalar_lea.hbm %s5, %s1513
          %s1515 = sshll.u32 %s1504, 4
          %s1516 = int_to_ptr.vmem [resolvable:$true] %s1515
          %s1517 = sshll.u32 %s1514, 4
          %s1518 = int_to_ptr.hbm [resolvable:$true] %s1517
          %1523 = dma.vmem_to_hbm [thread:$0]  %s1516, 1024, %s1518, %s1501, 128, 128, 8
        $region52: #{resblock_pallas.1} parent=39 // pred_fallthru
          _
      $region40: #{resblock_pallas.1} parent=5 // pred_fallthru
        _
      %p1524 = scmp.le.s32.totalorder 2, %s14
      // Predicated region
      $region53: #{resblock_pallas.1} parent=5 // pred_check
        %p1525 = pneg %p1524
      $region54: #{resblock_pallas.1} parent=5 // pred_check_branch
        %1527 = sbr.rel (%p1525) target = $region56
      $region55: #{resblock_pallas.1} parent=5 // pred_region
        %s1528 = ssub.s32 %s14, 2
        // Predicated region
        $region57: #{resblock_pallas.1} parent=55 // pred_check
          %p1529 = pneg %p169
        $region58: #{resblock_pallas.1} parent=55 // pred_check_branch
          %1531 = sbr.rel (%p1529) target = $region60
        $region59: #{resblock_pallas.1} parent=55 // pred_region
          %s1532 = sand.u32 %s154, 1
          %s1533 = scalar_lea.sflag [#allocation4], %s1532
          %s1534 = sand.u32 %s154, 1
          %s1535 = smul.addr %s1534, 64
          %s1536 = scalar_lea.vmem [#allocation3], %s1535
          %1538 = dma.done %s1533, 1024
        $region60: #{resblock_pallas.1} parent=55 // pred_fallthru
          _
      $region56: #{resblock_pallas.1} parent=5 // pred_fallthru
        _
    $region6: #{resblock_pallas.1} parent=1 // loop_footer
      %s18 = sadd.s32 1, %s14
    $region7: #{resblock_pallas.1} parent=1 // loop_footer_branch
      %13 = sbr.rel target = $region3
    $region8: #{resblock_pallas.1} parent=1 // loop_exit
      _
    %1539 = vsyncpa [#allocation4], 1
    %s1540 = scalar_lea.sflag [#allocation4], 1
    %1541 = vsyncpa %s1540, 1

</llo_original>
